<compile_context>
chip_gen: v5e
topology: v5e:2x2
jax: 0.10.0
libtpu: 0.0.40
codegen_flags: <defaults>
</compile_context>

<pallas_src>
import functools
import math

import jax
import jax.numpy as jnp
from jax.experimental import pallas as pl
from jax.experimental.pallas import tpu as pltpu

LANE = 128


def _round_up(x, m):
    return (x + m - 1) // m * m


# ---------------------------------------------------------------------------
# Fused GCN layer kernel:  out = act( (A_hat @ X) @ W + b )
#   grid = (row_tiles, k_tiles);  k (source-node reduction) is the last axis.
# ---------------------------------------------------------------------------
def _gcn_layer_kernel(a_ref, x_ref, w_ref, b_ref, o_ref, acc_ref, *, apply_relu):
    k = pl.program_id(1)

    @pl.when(k == 0)
    def _():
        acc_ref[...] = jnp.zeros_like(acc_ref)

    # Aggregation: acc[tm, F_in] += A_hat[tm, tk] @ X[tk, F_in]  (bf16 in, f32 acc)
    acc_ref[...] += jnp.dot(
        a_ref[...], x_ref[...], preferred_element_type=jnp.float32
    )

    @pl.when(k == pl.num_programs(1) - 1)
    def _():
        # Feature transform + bias + activation epilogue (weights resident in VMEM).
        r = jnp.dot(acc_ref[...], w_ref[...], preferred_element_type=jnp.float32)
        r = r + b_ref[...]
        if apply_relu:
            r = jnp.maximum(r, 0.0)
        o_ref[...] = r.astype(o_ref.dtype)


def gcn_layer(a_hat_pad, x_pad, w_pad, b_pad, *, relu, out_dtype=jnp.float32,
              tm=128, tk=128, stream_dtype=jnp.bfloat16):
    """One fused GCN layer on padded, lane-dense operands."""
    m_pad, k_pad = a_hat_pad.shape
    k_pad2, f_in = x_pad.shape
    f_in2, f_out = w_pad.shape
    assert k_pad == k_pad2 and f_in == f_in2
    assert m_pad % tm == 0 and k_pad % tk == 0
    assert f_in % LANE == 0 and f_out % LANE == 0

    grid = (m_pad // tm, k_pad // tk)
    kernel = functools.partial(_gcn_layer_kernel, apply_relu=relu)

    return pl.pallas_call(
        kernel,
        out_shape=jax.ShapeDtypeStruct((m_pad, f_out), out_dtype),
        grid_spec=pltpu.PrefetchScalarGridSpec(
            num_scalar_prefetch=0,
            grid=grid,
            in_specs=[
                pl.BlockSpec((tm, tk), lambda i, k: (i, k)),        # A_hat tile
                pl.BlockSpec((tk, f_in), lambda i, k: (k, 0)),      # X tile
                pl.BlockSpec((f_in, f_out), lambda i, k: (0, 0)),   # W (fetched once)
                pl.BlockSpec((1, f_out), lambda i, k: (0, 0)),      # bias (fetched once)
            ],
            out_specs=pl.BlockSpec((tm, f_out), lambda i, k: (i, 0)),
            scratch_shapes=[pltpu.VMEM((tm, f_in), jnp.float32)],
        ),
        compiler_params=pltpu.CompilerParams(
            dimension_semantics=("parallel", "arbitrary"),
            vmem_limit_bytes=32 * 1024 * 1024,
        ),
    )(
        a_hat_pad.astype(stream_dtype),
        x_pad.astype(stream_dtype),
        w_pad.astype(jnp.float32),
        b_pad.astype(jnp.float32),
    )


# ---------------------------------------------------------------------------
# Glue: GCN normalization (dense), parameter init, padding — plain JAX
# ---------------------------------------------------------------------------
def gcn_norm_dense(edge_index, num_nodes, edge_weight=None):
    """Dense D^-1/2 (A + I) D^-1/2 with A[dst, src] = w (PyG gcn_norm)."""
    src, dst = edge_index[0], edge_index[1]
    if edge_weight is None:
        edge_weight = jnp.ones(src.shape[0], dtype=jnp.float32)
    keep = (src != dst).astype(jnp.float32)  # identity below supplies self-loops
    a = jnp.zeros((num_nodes, num_nodes), jnp.float32).at[dst, src].add(
        edge_weight * keep
    )
    a = a + jnp.eye(num_nodes, dtype=jnp.float32)
    deg = a.sum(axis=1)
    dinv = jnp.where(deg > 0.0, jax.lax.rsqrt(deg), 0.0)
    return dinv[:, None] * a * dinv[None, :]


def glorot(key, shape):
    fan_in, fan_out = shape
    limit = jnp.sqrt(6.0 / (fan_in + fan_out))
    return jax.random.uniform(key, shape, jnp.float32, -limit, limit)


def init_gcn_params(key, in_channels, hidden_channels, out_channels):
    k1, k2 = jax.random.split(key)
    return {
        "w1": glorot(k1, (in_channels, hidden_channels)),
        "b1": jnp.zeros((hidden_channels,), jnp.float32),
        "w2": glorot(k2, (hidden_channels, out_channels)),
        "b2": jnp.zeros((out_channels,), jnp.float32),
    }


def _pad2d(x, rows, cols):
    out = jnp.zeros((rows, cols), jnp.float32)
    return out.at[: x.shape[0], : x.shape[1]].set(x.astype(jnp.float32))


def gcn_forward(params, x, a_hat, *, tm=128, tk=128, stream_dtype=jnp.bfloat16):
    """Full 2-layer GCN forward (eval mode) using two fused Pallas kernels."""
    # F.dropout(p=0.5, training=False) == identity.
    # TODO(synk): training-mode dropout (stochastic mask via pltpu.prng_*) not implemented.
    num_nodes, in_ch = x.shape
    hidden = params["w1"].shape[1]
    out_ch = params["w2"].shape[1]

    n_pad = _round_up(num_nodes, math.lcm(tm, tk))
    f_in_pad = _round_up(in_ch, LANE)
    f_hid_pad = _round_up(hidden, LANE)
    f_out_pad = _round_up(out_ch, LANE)

    a_pad = _pad2d(a_hat, n_pad, n_pad)
    x_pad = _pad2d(x, n_pad, f_in_pad)
    w1_pad = _pad2d(params["w1"], f_in_pad, f_hid_pad)
    b1_pad = _pad2d(params["b1"].reshape(1, -1), 1, f_hid_pad)
    w2_pad = _pad2d(params["w2"], f_hid_pad, f_out_pad)
    b2_pad = _pad2d(params["b2"].reshape(1, -1), 1, f_out_pad)

    # Layer 1 (fused aggregation + W1 + b1 + ReLU), emitted in bf16 so layer 2
    # streams it directly (no extra HBM-wide cast).  Padded A_hat columns are
    # zero, so bogus padded rows of h never contribute to layer 2.
    h_pad = gcn_layer(a_pad, x_pad, w1_pad, b1_pad, relu=True,
                      out_dtype=stream_dtype, tm=tm, tk=tk,
                      stream_dtype=stream_dtype)
    # Layer 2 (fused aggregation + W2 + b2), f32 output.
    out_pad = gcn_layer(a_pad, h_pad, w2_pad, b2_pad, relu=False,
                        out_dtype=jnp.float32, tm=tm, tk=tk,
                        stream_dtype=stream_dtype)
    return out_pad[:num_nodes, :out_ch]

    # TODO(synk): for realistic graphs, replace the dense A_hat stream with a
    # block-CSR layout + PrefetchScalarGridSpec scalar prefetch to skip empty K tiles.


def gcn_reference(params, x, a_hat, stream_dtype=jnp.bfloat16):
    """Same numerical recipe as the kernels (bf16 streams, f32 math)."""
    a = a_hat.astype(stream_dtype).astype(jnp.float32)
    xs = x.astype(stream_dtype).astype(jnp.float32)
    h = jnp.maximum((a @ xs) @ params["w1"] + params["b1"], 0.0)
    hs = h.astype(stream_dtype).astype(jnp.float32)
    return (a @ hs) @ params["w2"] + params["b2"]


def gcn_reference_f32(params, x, a_hat):
    h = jnp.maximum(a_hat @ (x @ params["w1"]) + params["b1"], 0.0)
    return a_hat @ (h @ params["w2"]) + params["b2"]


# ---------------------------------------------------------------------------
if __name__ == "__main__":
    # Non-tile-aligned node count to exercise the padding/tail path.
    NUM_NODES = 500
    NUM_EDGES = 2000
    IN_CH, HIDDEN_CH, OUT_CH = 32, 64, 16

    key = jax.random.PRNGKey(0)
    kx, ke1, ke2, kp = jax.random.split(key, 4)

    x = jax.random.normal(kx, (NUM_NODES, IN_CH), jnp.float32)
    edge_index = jnp.stack(
        [
            jax.random.randint(ke1, (NUM_EDGES,), 0, NUM_NODES),
            jax.random.randint(ke2, (NUM_EDGES,), 0, NUM_NODES),
        ],
        axis=0,
    ).astype(jnp.int32)

    a_hat = gcn_norm_dense(edge_index, NUM_NODES)
    params = init_gcn_params(kp, IN_CH, HIDDEN_CH, OUT_CH)

    fwd = jax.jit(gcn_forward)
    out = fwd(params, x, a_hat)
    out = jax.block_until_ready(out)
    assert out.shape == (NUM_NODES, OUT_CH)

    # Exact-recipe reference (bf16 streamed inputs, f32 accumulation).
    ref = gcn_reference(params, x, a_hat)
    assert jnp.allclose(out, ref, atol=1e-2, rtol=1e-2), float(
        jnp.max(jnp.abs(out - ref))
    )

    # Sanity check against the pure-f32 GCN forward (looser tolerance for bf16 streams).
    ref32 = gcn_reference_f32(params, x, a_hat)
    assert jnp.allclose(out, ref32, atol=5e-2, rtol=5e-2), float(
        jnp.max(jnp.abs(out - ref32))
    )

    print("KERNEL_OK")
</pallas_src>

<mosaic_0001>
module attributes {stable_mosaic.version = 11 : i64} {
  func.func @_gcn_layer_kernel(%arg0: i32, %arg1: i32, %arg2: memref<128x128xbf16, #tpu.memory_space<vmem>>, %arg3: memref<128x128xbf16, #tpu.memory_space<vmem>>, %arg4: memref<128x128xf32, #tpu.memory_space<vmem>>, %arg5: memref<1x128xf32, #tpu.memory_space<vmem>>, %arg6: memref<128x128xbf16, #tpu.memory_space<vmem>>, %arg7: memref<128x128xf32, #tpu.memory_space<vmem>>) attributes {dimension_semantics = [#tpu.dimension_semantics<parallel>, #tpu.dimension_semantics<arbitrary>], iteration_bounds = array<i64: 4, 4>, scalar_prefetch = 0 : i64, scratch_operands = 1 : i64, tpu.core_type = #tpu.core_type<tc>, window_params = [{transform_indices = @transform_0, window_bounds = array<i64: 128, 128>}, {transform_indices = @transform_1, window_bounds = array<i64: 128, 128>}, {pipeline_mode = #tpu.pipeline_mode<synchronous>, transform_indices = @transform_2, window_bounds = array<i64: 128, 128>}, {pipeline_mode = #tpu.pipeline_mode<synchronous>, transform_indices = @transform_3, window_bounds = array<i64: 1, 128>}, {transform_indices = @transform_4, window_bounds = array<i64: 128, 128>}]} {
    %c0_i32 = arith.constant 0 : i32
    %0 = arith.cmpi eq, %arg1, %c0_i32 : i32
    %1 = arith.extui %0 : i1 to i32
    %c0_i32_0 = arith.constant 0 : i32
    %2 = arith.cmpi ne, %1, %c0_i32_0 : i32
    scf.if %2 {
      %cst_9 = arith.constant 0.000000e+00 : f32
      %12 = vector.broadcast %cst_9 : f32 to vector<128x128xf32>
      %c0_10 = arith.constant 0 : index
      %c0_11 = arith.constant 0 : index
      %13 = vector.load %arg7[%c0_10, %c0_11] : memref<128x128xf32, #tpu.memory_space<vmem>>, vector<128x128xf32>
      tpu.vector_store %arg7[%c0_10, %c0_11], %12 {strides = array<i32>} : memref<128x128xf32, #tpu.memory_space<vmem>>, vector<128x128xf32>,
    } else {
    }
    %c0 = arith.constant 0 : index
    %c0_1 = arith.constant 0 : index
    %3 = vector.load %arg7[%c0, %c0_1] : memref<128x128xf32, #tpu.memory_space<vmem>>, vector<128x128xf32>
    %c0_2 = arith.constant 0 : index
    %c0_3 = arith.constant 0 : index
    %4 = vector.load %arg2[%c0_2, %c0_3] : memref<128x128xbf16, #tpu.memory_space<vmem>>, vector<128x128xbf16>
    %c0_4 = arith.constant 0 : index
    %c0_5 = arith.constant 0 : index
    %5 = vector.load %arg3[%c0_4, %c0_5] : memref<128x128xbf16, #tpu.memory_space<vmem>>, vector<128x128xbf16>
    %cst = arith.constant dense<0.000000e+00> : vector<128x128xf32>
    %6 = tpu.matmul %4, %5, %cst {dimension_numbers = #tpu.dot_dimension_numbers<[1], [0], [0], [1], [0, 0, 1, 1], [], []>} : vector<128x128xbf16>, vector<128x128xbf16>, vector<128x128xf32> -> vector<128x128xf32>
    %7 = arith.addf %3, %6 : vector<128x128xf32>
    %c0_6 = arith.constant 0 : index
    %c0_7 = arith.constant 0 : index
    %8 = vector.load %arg7[%c0_6, %c0_7] : memref<128x128xf32, #tpu.memory_space<vmem>>, vector<128x128xf32>
    tpu.vector_store %arg7[%c0_6, %c0_7], %7 {strides = array<i32>} : memref<128x128xf32, #tpu.memory_space<vmem>>, vector<128x128xf32>,
    %c3_i32 = arith.constant 3 : i32
    %9 = arith.cmpi eq, %arg1, %c3_i32 : i32
    %10 = arith.extui %9 : i1 to i32
    %c0_i32_8 = arith.constant 0 : i32
    %11 = arith.cmpi ne, %10, %c0_i32_8 : i32
    scf.if %11 {
      %c0_9 = arith.constant 0 : index
      %c0_10 = arith.constant 0 : index
      %12 = vector.load %arg7[%c0_9, %c0_10] : memref<128x128xf32, #tpu.memory_space<vmem>>, vector<128x128xf32>
      %c0_11 = arith.constant 0 : index
      %c0_12 = arith.constant 0 : index
      %13 = vector.load %arg4[%c0_11, %c0_12] : memref<128x128xf32, #tpu.memory_space<vmem>>, vector<128x128xf32>
      %cst_13 = arith.constant dense<0.000000e+00> : vector<128x128xf32>
      %14 = tpu.matmul %12, %13, %cst_13 {dimension_numbers = #tpu.dot_dimension_numbers<[1], [0], [0], [1], [0, 0, 1, 1], [], []>} : vector<128x128xf32>, vector<128x128xf32>, vector<128x128xf32> -> vector<128x128xf32>
      %c0_14 = arith.constant 0 : index
      %c0_15 = arith.constant 0 : index
      %15 = vector.load %arg5[%c0_14, %c0_15] : memref<1x128xf32, #tpu.memory_space<vmem>>, vector<1x128xf32>
      %16 = vector.broadcast %15 : vector<1x128xf32> to vector<128x128xf32>
      %17 = arith.addf %14, %16 : vector<128x128xf32>
      %cst_16 = arith.constant 0.000000e+00 : f32
      %18 = vector.broadcast %cst_16 : f32 to vector<128x128xf32>
      %19 = arith.maximumf %17, %18 : vector<128x128xf32>
      %20 = arith.truncf %19 : vector<128x128xf32> to vector<128x128xbf16>
      %c0_17 = arith.constant 0 : index
      %c0_18 = arith.constant 0 : index
      %21 = vector.load %arg6[%c0_17, %c0_18] : memref<128x128xbf16, #tpu.memory_space<vmem>>, vector<128x128xbf16>
      tpu.vector_store %arg6[%c0_17, %c0_18], %20 {strides = array<i32>} : memref<128x128xbf16, #tpu.memory_space<vmem>>, vector<128x128xbf16>,
    } else {
    }
    return
  }
  func.func @transform_0(%arg0: i32, %arg1: i32) -> (i32, i32) {
    %c0_i32 = arith.constant 0 : i32
    return %arg0, %arg1 : i32, i32
  }
  func.func @transform_1(%arg0: i32, %arg1: i32) -> (i32, i32) {
    %c0_i32 = arith.constant 0 : i32
    %c0_i32_0 = arith.constant 0 : i32
    return %arg1, %c0_i32 : i32, i32
  }
  func.func @transform_2(%arg0: i32, %arg1: i32) -> (i32, i32) {
    %c0_i32 = arith.constant 0 : i32
    %c0_i32_0 = arith.constant 0 : i32
    %c0_i32_1 = arith.constant 0 : i32
    return %c0_i32, %c0_i32_0 : i32, i32
  }
  func.func @transform_3(%arg0: i32, %arg1: i32) -> (i32, i32) {
    %c0_i32 = arith.constant 0 : i32
    %c0_i32_0 = arith.constant 0 : i32
    %c0_i32_1 = arith.constant 0 : i32
    return %c0_i32, %c0_i32_0 : i32, i32
  }
  func.func @transform_4(%arg0: i32, %arg1: i32) -> (i32, i32) {
    %c0_i32 = arith.constant 0 : i32
    %c0_i32_0 = arith.constant 0 : i32
    return %arg0, %c0_i32 : i32, i32
  }
}

module attributes {stable_mosaic.version = 11 : i64} {
  func.func @_gcn_layer_kernel(%arg0: i32, %arg1: i32, %arg2: memref<128x128xbf16, #tpu.memory_space<vmem>>, %arg3: memref<128x128xbf16, #tpu.memory_space<vmem>>, %arg4: memref<128x128xf32, #tpu.memory_space<vmem>>, %arg5: memref<1x128xf32, #tpu.memory_space<vmem>>, %arg6: memref<128x128xf32, #tpu.memory_space<vmem>>, %arg7: memref<128x128xf32, #tpu.memory_space<vmem>>) attributes {dimension_semantics = [#tpu.dimension_semantics<parallel>, #tpu.dimension_semantics<arbitrary>], iteration_bounds = array<i64: 4, 4>, scalar_prefetch = 0 : i64, scratch_operands = 1 : i64, tpu.core_type = #tpu.core_type<tc>, window_params = [{transform_indices = @transform_0, window_bounds = array<i64: 128, 128>}, {transform_indices = @transform_1, window_bounds = array<i64: 128, 128>}, {pipeline_mode = #tpu.pipeline_mode<synchronous>, transform_indices = @transform_2, window_bounds = array<i64: 128, 128>}, {pipeline_mode = #tpu.pipeline_mode<synchronous>, transform_indices = @transform_3, window_bounds = array<i64: 1, 128>}, {transform_indices = @transform_4, window_bounds = array<i64: 128, 128>}]} {
    %c0_i32 = arith.constant 0 : i32
    %0 = arith.cmpi eq, %arg1, %c0_i32 : i32
    %1 = arith.extui %0 : i1 to i32
    %c0_i32_0 = arith.constant 0 : i32
    %2 = arith.cmpi ne, %1, %c0_i32_0 : i32
    scf.if %2 {
      %cst_9 = arith.constant 0.000000e+00 : f32
      %12 = vector.broadcast %cst_9 : f32 to vector<128x128xf32>
      %c0_10 = arith.constant 0 : index
      %c0_11 = arith.constant 0 : index
      %13 = vector.load %arg7[%c0_10, %c0_11] : memref<128x128xf32, #tpu.memory_space<vmem>>, vector<128x128xf32>
      tpu.vector_store %arg7[%c0_10, %c0_11], %12 {strides = array<i32>} : memref<128x128xf32, #tpu.memory_space<vmem>>, vector<128x128xf32>,
    } else {
    }
    %c0 = arith.constant 0 : index
    %c0_1 = arith.constant 0 : index
    %3 = vector.load %arg7[%c0, %c0_1] : memref<128x128xf32, #tpu.memory_space<vmem>>, vector<128x128xf32>
    %c0_2 = arith.constant 0 : index
    %c0_3 = arith.constant 0 : index
    %4 = vector.load %arg2[%c0_2, %c0_3] : memref<128x128xbf16, #tpu.memory_space<vmem>>, vector<128x128xbf16>
    %c0_4 = arith.constant 0 : index
    %c0_5 = arith.constant 0 : index
    %5 = vector.load %arg3[%c0_4, %c0_5] : memref<128x128xbf16, #tpu.memory_space<vmem>>, vector<128x128xbf16>
    %cst = arith.constant dense<0.000000e+00> : vector<128x128xf32>
    %6 = tpu.matmul %4, %5, %cst {dimension_numbers = #tpu.dot_dimension_numbers<[1], [0], [0], [1], [0, 0, 1, 1], [], []>} : vector<128x128xbf16>, vector<128x128xbf16>, vector<128x128xf32> -> vector<128x128xf32>
    %7 = arith.addf %3, %6 : vector<128x128xf32>
    %c0_6 = arith.constant 0 : index
    %c0_7 = arith.constant 0 : index
    %8 = vector.load %arg7[%c0_6, %c0_7] : memref<128x128xf32, #tpu.memory_space<vmem>>, vector<128x128xf32>
    tpu.vector_store %arg7[%c0_6, %c0_7], %7 {strides = array<i32>} : memref<128x128xf32, #tpu.memory_space<vmem>>, vector<128x128xf32>,
    %c3_i32 = arith.constant 3 : i32
    %9 = arith.cmpi eq, %arg1, %c3_i32 : i32
    %10 = arith.extui %9 : i1 to i32
    %c0_i32_8 = arith.constant 0 : i32
    %11 = arith.cmpi ne, %10, %c0_i32_8 : i32
    scf.if %11 {
      %c0_9 = arith.constant 0 : index
      %c0_10 = arith.constant 0 : index
      %12 = vector.load %arg7[%c0_9, %c0_10] : memref<128x128xf32, #tpu.memory_space<vmem>>, vector<128x128xf32>
      %c0_11 = arith.constant 0 : index
      %c0_12 = arith.constant 0 : index
      %13 = vector.load %arg4[%c0_11, %c0_12] : memref<128x128xf32, #tpu.memory_space<vmem>>, vector<128x128xf32>
      %cst_13 = arith.constant dense<0.000000e+00> : vector<128x128xf32>
      %14 = tpu.matmul %12, %13, %cst_13 {dimension_numbers = #tpu.dot_dimension_numbers<[1], [0], [0], [1], [0, 0, 1, 1], [], []>} : vector<128x128xf32>, vector<128x128xf32>, vector<128x128xf32> -> vector<128x128xf32>
      %c0_14 = arith.constant 0 : index
      %c0_15 = arith.constant 0 : index
      %15 = vector.load %arg5[%c0_14, %c0_15] : memref<1x128xf32, #tpu.memory_space<vmem>>, vector<1x128xf32>
      %16 = vector.broadcast %15 : vector<1x128xf32> to vector<128x128xf32>
      %17 = arith.addf %14, %16 : vector<128x128xf32>
      %c0_16 = arith.constant 0 : index
      %c0_17 = arith.constant 0 : index
      %18 = vector.load %arg6[%c0_16, %c0_17] : memref<128x128xf32, #tpu.memory_space<vmem>>, vector<128x128xf32>
      tpu.vector_store %arg6[%c0_16, %c0_17], %17 {strides = array<i32>} : memref<128x128xf32, #tpu.memory_space<vmem>>, vector<128x128xf32>,
    } else {
    }
    return
  }
  func.func @transform_0(%arg0: i32, %arg1: i32) -> (i32, i32) {
    %c0_i32 = arith.constant 0 : i32
    return %arg0, %arg1 : i32, i32
  }
  func.func @transform_1(%arg0: i32, %arg1: i32) -> (i32, i32) {
    %c0_i32 = arith.constant 0 : i32
    %c0_i32_0 = arith.constant 0 : i32
    return %arg1, %c0_i32 : i32, i32
  }
  func.func @transform_2(%arg0: i32, %arg1: i32) -> (i32, i32) {
    %c0_i32 = arith.constant 0 : i32
    %c0_i32_0 = arith.constant 0 : i32
    %c0_i32_1 = arith.constant 0 : i32
    return %c0_i32, %c0_i32_0 : i32, i32
  }
  func.func @transform_3(%arg0: i32, %arg1: i32) -> (i32, i32) {
    %c0_i32 = arith.constant 0 : i32
    %c0_i32_0 = arith.constant 0 : i32
    %c0_i32_1 = arith.constant 0 : i32
    return %c0_i32, %c0_i32_0 : i32, i32
  }
  func.func @transform_4(%arg0: i32, %arg1: i32) -> (i32, i32) {
    %c0_i32 = arith.constant 0 : i32
    %c0_i32_0 = arith.constant 0 : i32
    return %arg0, %c0_i32 : i32, i32
  }
}

</mosaic_0001>

<llo_original>
// kernel: gcn_forward.2
$region0: #{gcn_forward.2}
  #allocation0 [shape = 'u32[]', space=smem, size = 0x4, offset = 0x4, fixed_abs, tag = 'smem constant byte address 0x4 - core index']
  #allocation1 [shape = 'u32[72,128]{1,0:T(1,128)}', space=vmem, size = 0x9000, scoped, tag = 'internal scratch']
  #allocation2 [shape = 'f32[128,128]{1,0:T(8,128)}', space=vmem, size = 0x10000, scoped, tag = 'scratch operand']
  %s0 = inlined_call_operand.vmem [shape: bf16[512,512], index: 0, kind: input, shape index: {}]
  %s1 = inlined_call_operand.vmem [shape: bf16[512,128], index: 1, kind: input, shape index: {}]
  %s2 = inlined_call_operand.vmem [shape: f32[128,128], index: 2, kind: input, shape index: {}]
  %s3 = inlined_call_operand.vmem [shape: f32[1,128], index: 3, kind: input, shape index: {}]
  %s4 = inlined_call_operand.vmem [shape: bf16[512,128], index: 4, kind: output, shape index: {}]
  %s5 = sld [smem:[#allocation0]]
  $region98: #{gcn_forward.2} parent=0
    _
  %s7 = ssub.s32 1, %s5
  %s8 = scalar_select 0, %s7, %s5
  $region1: #{gcn_forward.2} parent=0
    #allocation3 [shape = 'u8[65536]{0}', space=vmem, size = 0x10000, scoped, tag = 'input window, operand 0']
    loop: start=0, step=1, limit=18
    $region2: #{gcn_forward.2} parent=1 // loop_pre_header
      _
    $region3: #{gcn_forward.2} parent=1 // loop_header
      %s10 = sphi 0, %s14
      %p11 = scmp.ge.s32.totalorder %s10, 18
      %s17 = sphi 0, %s29
      %s18 = sphi 0, %s25
      %s19 = sphi 0, %s17
      %s20 = sphi 0, %s18
      %s21 = sphi 0, %s19
      %s22 = sphi 0, %s20
      %s34 = sphi 0, %s36
      %s37 = sphi 0, %s34
      %s38 = sphi 0, %s37
      %s54 = sphi 0, %s38
      %s60 = sphi 0, %s62
      %s63 = sphi 0, %s60
      %s64 = sphi 0, %s63
      %s80 = sphi 0, %s64
      %s84 = sphi 0, %s84
      %s86 = sphi 0, %s84
      %s87 = sphi 0, %s86
      %s101 = sphi 0, %s87
      %s105 = sphi 0, %s105
      %s107 = sphi 0, %s105
      %s108 = sphi 0, %s107
      %s122 = sphi 0, %s108
      %s128 = sphi 0, %s130
      %s131 = sphi 0, %s128
      %s132 = sphi 0, %s131
      %s148 = sphi 0, %s132
    $region4: #{gcn_forward.2} parent=1 // loop_header_branch
      %13 = sbr.rel (%p11) target = $region8
    $region5: #{gcn_forward.2} parent=1 // loop_body
      %s15 = ssub.s32 %s10, 1
      %s16 = ssub.s32 %s10, 2
      %s23 = sadd.s32 1, %s18
      %p24 = scmp.ge.s32.totalorder %s23, 4
      %s25 = scalar_select %p24, 0, %s23
      %s26 = sadd.s32 1, %s17
      %s27 = scalar_select %p24, %s26, %s17
      %p28 = scmp.ge.s32.totalorder %s27, 4
      %s29 = scalar_select %p28, 0, %s27
      %s30 = ssub.s32 %s17, %s29
      %s31 = ssub.s32 %s18, %s25
      %s32 = sor.u32 %s30, %s31
      %p33 = scmp.eq.s32.totalorder %s32, 0
      %s35 = sadd.s32 %s34, 1
      %s36 = scalar_select %p33, %s34, %s35
      %p39 = pneg %p33
      %p40 = scmp.eq.s32.totalorder %s10, 15
      %p41 = por %p39, %p40
      %p42 = scmp.ne.s32.totalorder %s34, %s37
      %p43 = scmp.eq.s32.totalorder %s10, 0
      %p44 = por %p42, %p43
      %p45 = scmp.ne.s32.totalorder %s34, %s37
      %p46 = scmp.eq.s32.totalorder %s15, 15
      %p47 = por %p45, %p46
      %p48 = scmp.ne.s32.totalorder %s37, %s38
      %p49 = scmp.eq.s32.totalorder %s15, 0
      %p50 = por %p48, %p49
      %p51 = scmp.ne.s32.totalorder %s37, %s38
      %p52 = scmp.eq.s32.totalorder %s16, 15
      %p53 = por %p51, %p52
      %p55 = scmp.ne.s32.totalorder %s38, %s54
      %p56 = scmp.eq.s32.totalorder %s16, 0
      %p57 = por %p55, %p56
      %s58 = ssub.s32 %s18, %s25
      %p59 = scmp.eq.s32.totalorder %s58, 0
      %s61 = sadd.s32 %s60, 1
      %s62 = scalar_select %p59, %s60, %s61
      %p65 = pneg %p59
      %p66 = scmp.eq.s32.totalorder %s10, 15
      %p67 = por %p65, %p66
      %p68 = scmp.ne.s32.totalorder %s60, %s63
      %p69 = scmp.eq.s32.totalorder %s10, 0
      %p70 = por %p68, %p69
      %p71 = scmp.ne.s32.totalorder %s60, %s63
      %p72 = scmp.eq.s32.totalorder %s15, 15
      %p73 = por %p71, %p72
      %p74 = scmp.ne.s32.totalorder %s63, %s64
      %p75 = scmp.eq.s32.totalorder %s15, 0
      %p76 = por %p74, %p75
      %p77 = scmp.ne.s32.totalorder %s63, %s64
      %p78 = scmp.eq.s32.totalorder %s16, 15
      %p79 = por %p77, %p78
      %p81 = scmp.ne.s32.totalorder %s64, %s80
      %p82 = scmp.eq.s32.totalorder %s16, 0
      %p83 = por %p81, %p82
      %s85 = sadd.s32 %s84, 1
      %p88 = scmp.eq.s32.totalorder %s10, 15
      %p89 = scmp.ne.s32.totalorder %s84, %s86
      %p90 = scmp.eq.s32.totalorder %s10, 0
      %p91 = por %p89, %p90
      %p92 = scmp.ne.s32.totalorder %s84, %s86
      %p93 = scmp.eq.s32.totalorder %s15, 15
      %p94 = por %p92, %p93
      %p95 = scmp.ne.s32.totalorder %s86, %s87
      %p96 = scmp.eq.s32.totalorder %s15, 0
      %p97 = por %p95, %p96
      %p98 = scmp.ne.s32.totalorder %s86, %s87
      %p99 = scmp.eq.s32.totalorder %s16, 15
      %p100 = por %p98, %p99
      %p102 = scmp.ne.s32.totalorder %s87, %s101
      %p103 = scmp.eq.s32.totalorder %s16, 0
      %p104 = por %p102, %p103
      %s106 = sadd.s32 %s105, 1
      %p109 = scmp.eq.s32.totalorder %s10, 15
      %p110 = scmp.ne.s32.totalorder %s105, %s107
      %p111 = scmp.eq.s32.totalorder %s10, 0
      %p112 = por %p110, %p111
      %p113 = scmp.ne.s32.totalorder %s105, %s107
      %p114 = scmp.eq.s32.totalorder %s15, 15
      %p115 = por %p113, %p114
      %p116 = scmp.ne.s32.totalorder %s107, %s108
      %p117 = scmp.eq.s32.totalorder %s15, 0
      %p118 = por %p116, %p117
      %p119 = scmp.ne.s32.totalorder %s107, %s108
      %p120 = scmp.eq.s32.totalorder %s16, 15
      %p121 = por %p119, %p120
      %p123 = scmp.ne.s32.totalorder %s108, %s122
      %p124 = scmp.eq.s32.totalorder %s16, 0
      %p125 = por %p123, %p124
      %s126 = ssub.s32 %s17, %s29
      %p127 = scmp.eq.s32.totalorder %s126, 0
      %s129 = sadd.s32 %s128, 1
      %s130 = scalar_select %p127, %s128, %s129
      %p133 = pneg %p127
      %p134 = scmp.eq.s32.totalorder %s10, 15
      %p135 = por %p133, %p134
      %p136 = scmp.ne.s32.totalorder %s128, %s131
      %p137 = scmp.eq.s32.totalorder %s10, 0
      %p138 = por %p136, %p137
      %p139 = scmp.ne.s32.totalorder %s128, %s131
      %p140 = scmp.eq.s32.totalorder %s15, 15
      %p141 = por %p139, %p140
      %p142 = scmp.ne.s32.totalorder %s131, %s132
      %p143 = scmp.eq.s32.totalorder %s15, 0
      %p144 = por %p142, %p143
      %p145 = scmp.ne.s32.totalorder %s131, %s132
      %p146 = scmp.eq.s32.totalorder %s16, 15
      %p147 = por %p145, %p146
      %p149 = scmp.ne.s32.totalorder %s132, %s148
      %p150 = scmp.eq.s32.totalorder %s16, 0
      %p151 = por %p149, %p150
      %p152 = scmp.le.s32.totalorder 1, %s10
      %p153 = scmp.lt.s32.totalorder %s10, 17
      %p154 = pnand %p152, %p153
      %p155 = pneg %p154
      // Predicated region
      $region9: #{gcn_forward.2} parent=5 // pred_check
        _
      $region10: #{gcn_forward.2} parent=5 // pred_check_branch
        %157 = sbr.rel (%p154) target = $region12
      $region11: #{gcn_forward.2} parent=5 // pred_region
        %s158 = ssub.s32 %s10, 1
        // Predicated region
        $region13: #{gcn_forward.2} parent=11 // pred_check
          %p159 = pneg %p97
        $region14: #{gcn_forward.2} parent=11 // pred_check_branch
          %161 = sbr.rel (%p159) target = $region16
        $region15: #{gcn_forward.2} parent=11 // pred_region
          _
        $region16: #{gcn_forward.2} parent=11 // pred_fallthru
          _
        // Predicated region
        $region17: #{gcn_forward.2} parent=11 // pred_check
          %p162 = pneg %p118
        $region18: #{gcn_forward.2} parent=11 // pred_check_branch
          %164 = sbr.rel (%p162) target = $region20
        $region19: #{gcn_forward.2} parent=11 // pred_region
          _
        $region20: #{gcn_forward.2} parent=11 // pred_fallthru
          _
      $region12: #{gcn_forward.2} parent=5 // pred_fallthru
        _
      %p165 = scmp.lt.s32.totalorder %s10, 16
      // Predicated region
      $region21: #{gcn_forward.2} parent=5 // pred_check
        %p166 = pneg %p165
      $region22: #{gcn_forward.2} parent=5 // pred_check_branch
        %168 = sbr.rel (%p166) target = $region24
      $region23: #{gcn_forward.2} parent=5 // pred_region
        // Predicated region
        $region25: #{gcn_forward.2} parent=23 // pred_check
          %p169 = pneg %p44
        $region26: #{gcn_forward.2} parent=23 // pred_check_branch
          %171 = sbr.rel (%p169) target = $region28
        $region27: #{gcn_forward.2} parent=23 // pred_region
          %s172 = sand.u32 %s34, 1
          %s173 = sand.u32 %s34, 1
          %s174 = smul.addr %s173, 64
          %s175 = scalar_lea.vmem [#allocation3], %s174
          %s176 = smul.u32 16, %s17
          %s177 = smul.addr %s176, 4
          %s178 = sadd.s32 %s18, %s177
          %s179 = smul.addr %s178, 4
          %s180 = scalar_lea.vmem %s0, %s179
          // Predicated region
          $region29: #{gcn_forward.2} parent=27 // pred_check
            _
          $region30: #{gcn_forward.2} parent=27 // pred_check_branch
            %182 = sbr.rel (0) target = $region32
          $region31: #{gcn_forward.2} parent=27 // pred_region
            // Predicated region
            $region33: #{gcn_forward.2} parent=31 // pred_check
              _
            $region34: #{gcn_forward.2} parent=31 // pred_check_branch
              %184 = sbr.rel target = $region36
            $region35: #{gcn_forward.2} parent=31 // pred_region
              // Predicated region
              $region48: #{gcn_forward.2} parent=35 // pred_check
                _
              $region49: #{gcn_forward.2} parent=35 // pred_check_branch
                %230 = sbr.rel (0) target = $region51
              $region50: #{gcn_forward.2} parent=35 // pred_region
                loop: start=0, step=1, limit=1
                $region52: #{gcn_forward.2} parent=50 // loop_pre_header
                  _
                $region53: #{gcn_forward.2} parent=50 // loop_header
                  %s232 = sphi 0, %s236
                  %p233 = scmp.ge.s32.totalorder %s232, 1
                  %s237 = sphi %s180, %s180
                  %s238 = sphi %s175, %s175
                $region54: #{gcn_forward.2} parent=50 // loop_header_branch
                  %235 = sbr.rel (%p233) target = $region58
                $region55: #{gcn_forward.2} parent=50 // loop_body
                  _
                $region56: #{gcn_forward.2} parent=50 // loop_footer
                  %s236 = sadd.s32 1, %s232
                $region57: #{gcn_forward.2} parent=50 // loop_footer_branch
                  %231 = sbr.rel target = $region53
                $region58: #{gcn_forward.2} parent=50 // loop_exit
                  _
                %s240 = ssub.s32 16, 1
                loop: start=0, step=1, limit=1
                $region59: #{gcn_forward.2} parent=50 // loop_pre_header
                  _
                $region60: #{gcn_forward.2} parent=50 // loop_header
                  %s242 = sphi 0, %s246
                  %p243 = scmp.ge.s32.totalorder %s242, 1
                  %s247 = sphi %s180, %s180
                  %s248 = sphi %s175, %s175
                $region61: #{gcn_forward.2} parent=50 // loop_header_branch
                  %245 = sbr.rel (%p243) target = $region65
                $region62: #{gcn_forward.2} parent=50 // loop_body
                  %v249 = vld [vmem:[%s247] sm:%s240]
                  %250 = vst [vmem:[%s248] sm:%s240] %v249
                  %v251 = vld [vmem:[%s247 + $0x10] sm:%s240]
                  %252 = vst [vmem:[%s248 + $0x4] sm:%s240] %v251
                  %v253 = vld [vmem:[%s247 + $0x20] sm:%s240]
                  %254 = vst [vmem:[%s248 + $0x8] sm:%s240] %v253
                  %v255 = vld [vmem:[%s247 + $0x30] sm:%s240]
                  %256 = vst [vmem:[%s248 + $0xc] sm:%s240] %v255
                  %v257 = vld [vmem:[%s247 + $0x40] sm:%s240]
                  %258 = vst [vmem:[%s248 + $0x10] sm:%s240] %v257
                  %v259 = vld [vmem:[%s247 + $0x50] sm:%s240]
                  %260 = vst [vmem:[%s248 + $0x14] sm:%s240] %v259
                  %v261 = vld [vmem:[%s247 + $0x60] sm:%s240]
                  %262 = vst [vmem:[%s248 + $0x18] sm:%s240] %v261
                  %v263 = vld [vmem:[%s247 + $0x70] sm:%s240]
                  %264 = vst [vmem:[%s248 + $0x1c] sm:%s240] %v263
                  %v265 = vld [vmem:[%s247 + $0x80] sm:%s240]
                  %266 = vst [vmem:[%s248 + $0x20] sm:%s240] %v265
                  %v267 = vld [vmem:[%s247 + $0x90] sm:%s240]
                  %268 = vst [vmem:[%s248 + $0x24] sm:%s240] %v267
                  %v269 = vld [vmem:[%s247 + $0xa0] sm:%s240]
                  %270 = vst [vmem:[%s248 + $0x28] sm:%s240] %v269
                  %v271 = vld [vmem:[%s247 + $0xb0] sm:%s240]
                  %272 = vst [vmem:[%s248 + $0x2c] sm:%s240] %v271
                  %v273 = vld [vmem:[%s247 + $0xc0] sm:%s240]
                  %274 = vst [vmem:[%s248 + $0x30] sm:%s240] %v273
                  %v275 = vld [vmem:[%s247 + $0xd0] sm:%s240]
                  %276 = vst [vmem:[%s248 + $0x34] sm:%s240] %v275
                  %v277 = vld [vmem:[%s247 + $0xe0] sm:%s240]
                  %278 = vst [vmem:[%s248 + $0x38] sm:%s240] %v277
                  %v279 = vld [vmem:[%s247 + $0xf0] sm:%s240]
                  %280 = vst [vmem:[%s248 + $0x3c] sm:%s240] %v279
                $region63: #{gcn_forward.2} parent=50 // loop_footer
                  %s246 = sadd.s32 1, %s242
                $region64: #{gcn_forward.2} parent=50 // loop_footer_branch
                  %241 = sbr.rel target = $region60
                $region65: #{gcn_forward.2} parent=50 // loop_exit
                  _
              $region51: #{gcn_forward.2} parent=35 // pred_fallthru
                _
            $region36: #{gcn_forward.2} parent=31 // pred_fallthru
              _
            // Predicated region
            $region37: #{gcn_forward.2} parent=31 // pred_check
              _
            $region38: #{gcn_forward.2} parent=31 // pred_check_branch
              %186 = sbr.rel (0) target = $region40
            $region39: #{gcn_forward.2} parent=31 // pred_region
              %s188 = ssub.s32 16, 1
              loop: start=0, step=1, limit=1
              $region41: #{gcn_forward.2} parent=39 // loop_pre_header
                _
              $region42: #{gcn_forward.2} parent=39 // loop_header
                %s190 = sphi 0, %s194
                %p191 = scmp.ge.s32.totalorder %s190, 1
                %s195 = sphi %s180, %s180
                %s196 = sphi %s175, %s175
              $region43: #{gcn_forward.2} parent=39 // loop_header_branch
                %193 = sbr.rel (%p191) target = $region47
              $region44: #{gcn_forward.2} parent=39 // loop_body
                %v197 = vld [vmem:[%s195] sm:%s188]
                %198 = vst [vmem:[%s196] sm:%s188] %v197
                %v199 = vld [vmem:[%s195 + $0x10] sm:%s188]
                %200 = vst [vmem:[%s196 + $0x4] sm:%s188] %v199
                %v201 = vld [vmem:[%s195 + $0x20] sm:%s188]
                %202 = vst [vmem:[%s196 + $0x8] sm:%s188] %v201
                %v203 = vld [vmem:[%s195 + $0x30] sm:%s188]
                %204 = vst [vmem:[%s196 + $0xc] sm:%s188] %v203
                %v205 = vld [vmem:[%s195 + $0x40] sm:%s188]
                %206 = vst [vmem:[%s196 + $0x10] sm:%s188] %v205
                %v207 = vld [vmem:[%s195 + $0x50] sm:%s188]
                %208 = vst [vmem:[%s196 + $0x14] sm:%s188] %v207
                %v209 = vld [vmem:[%s195 + $0x60] sm:%s188]
                %210 = vst [vmem:[%s196 + $0x18] sm:%s188] %v209
                %v211 = vld [vmem:[%s195 + $0x70] sm:%s188]
                %212 = vst [vmem:[%s196 + $0x1c] sm:%s188] %v211
                %v213 = vld [vmem:[%s195 + $0x80] sm:%s188]
                %214 = vst [vmem:[%s196 + $0x20] sm:%s188] %v213
                %v215 = vld [vmem:[%s195 + $0x90] sm:%s188]
                %216 = vst [vmem:[%s196 + $0x24] sm:%s188] %v215
                %v217 = vld [vmem:[%s195 + $0xa0] sm:%s188]
                %218 = vst [vmem:[%s196 + $0x28] sm:%s188] %v217
                %v219 = vld [vmem:[%s195 + $0xb0] sm:%s188]
                %220 = vst [vmem:[%s196 + $0x2c] sm:%s188] %v219
                %v221 = vld [vmem:[%s195 + $0xc0] sm:%s188]
                %222 = vst [vmem:[%s196 + $0x30] sm:%s188] %v221
                %v223 = vld [vmem:[%s195 + $0xd0] sm:%s188]
                %224 = vst [vmem:[%s196 + $0x34] sm:%s188] %v223
                %v225 = vld [vmem:[%s195 + $0xe0] sm:%s188]
                %226 = vst [vmem:[%s196 + $0x38] sm:%s188] %v225
                %v227 = vld [vmem:[%s195 + $0xf0] sm:%s188]
                %228 = vst [vmem:[%s196 + $0x3c] sm:%s188] %v227
              $region45: #{gcn_forward.2} parent=39 // loop_footer
                %s194 = sadd.s32 1, %s190
              $region46: #{gcn_forward.2} parent=39 // loop_footer_branch
                %189 = sbr.rel target = $region42
              $region47: #{gcn_forward.2} parent=39 // loop_exit
                _
            $region40: #{gcn_forward.2} parent=31 // pred_fallthru
              _
          $region32: #{gcn_forward.2} parent=27 // pred_fallthru
            _
          %281 = vnop
        $region28: #{gcn_forward.2} parent=23 // pred_fallthru
          _
        // Predicated region
        $region66: #{gcn_forward.2} parent=23 // pred_check
          %p282 = pneg %p70
        $region67: #{gcn_forward.2} parent=23 // pred_check_branch
          %284 = sbr.rel (%p282) target = $region69
        $region68: #{gcn_forward.2} parent=23 // pred_region
          %s285 = smul.u32 16, %s18
          %p286 = scmp.lt.s32.totalorder %s285, 63
          %s287 = scalar_select %p286, %s285, 63
          %s288 = smul.addr %s287, 4
          %s289 = scalar_lea.vmem %s1, %s288
          %s290 = smul.u32 16, %s18
        $region69: #{gcn_forward.2} parent=23 // pred_fallthru
          _
      $region24: #{gcn_forward.2} parent=5 // pred_fallthru
        _
      %p291 = scmp.le.s32.totalorder 1, %s10
      %p292 = scmp.lt.s32.totalorder %s10, 17
      %p293 = pnand %p291, %p292
      %p294 = pneg %p293
      // Predicated region
      $region70: #{gcn_forward.2} parent=5 // pred_check
        _
      $region71: #{gcn_forward.2} parent=5 // pred_check_branch
        %296 = sbr.rel (%p293) target = $region73
      $region72: #{gcn_forward.2} parent=5 // pred_region
        %s297 = ssub.s32 %s10, 1
        %s298 = sand.u32 %s37, 1
        %s299 = sand.u32 %s37, 1
        %s300 = smul.addr %s299, 64
        %s301 = scalar_lea.vmem [#allocation3], %s300
        // Predicated region
        $region74: #{gcn_forward.2} parent=72 // pred_check
          %p302 = pneg %p50
        $region75: #{gcn_forward.2} parent=72 // pred_check_branch
          %304 = sbr.rel (%p302) target = $region77
        $region76: #{gcn_forward.2} parent=72 // pred_region
          _
        $region77: #{gcn_forward.2} parent=72 // pred_fallthru
          _
        %s305 = sand.u32 %s37, 1
        %s306 = sand.u32 %s37, 1
        %s307 = smul.addr %s306, 64
        %s308 = scalar_lea.vmem [#allocation3], %s307
        %p309 = pneg %p50
        %p310 = pneg %p47
        %s311 = smul.u32 16, %s20
        %p312 = scmp.lt.s32.totalorder %s311, 63
        %s313 = scalar_select %p312, %s311, 63
        %s314 = smul.addr %s313, 4
        %s315 = scalar_lea.vmem %s1, %s314
        %p316 = pneg %p76
        %p317 = pneg %p73
        %p318 = pneg %p97
        %p319 = pneg %p94
        %p320 = pneg %p118
        %p321 = pneg %p115
        %p322 = pneg %p144
        %p323 = pneg %p141
        %s324 = smul.u32 16, %s19
        %p325 = scmp.lt.s32.totalorder %s324, 63
        %s326 = scalar_select %p325, %s324, 63
        %s327 = smul.addr %s326, 4
        %s328 = scalar_lea.vmem %s4, %s327
        %s329 = smul.u32 16, %s19
        %s330 = smul.u32 16, %s20
        %p331 = scmp.lt.s32.totalorder %s330, 63
        %s332 = scalar_select %p331, %s330, 63
        %s333 = smul.addr %s332, 4
        %s334 = scalar_lea.vmem %s1, %s333
        %s335 = smul.u32 16, %s20
        %s336 = smul.u32 16, %s19
        %p337 = scmp.lt.s32.totalorder %s336, 63
        %s338 = scalar_select %p337, %s336, 63
        %s339 = smul.addr %s338, 4
        %s340 = scalar_lea.vmem %s4, %s339
        %s341 = smul.u32 16, %s19
        %p342 = scmp.eq.s32.totalorder %s20, 0
        // Predicated region
        $region78: #{gcn_forward.2} parent=72 // pred_check
          %p343 = pneg %p342
        $region79: #{gcn_forward.2} parent=72 // pred_check_branch
          %345 = sbr.rel (%p343) target = $region81
        $region80: #{gcn_forward.2} parent=72 // pred_region
          %346 = vst [vmem:[#allocation2] sm:$0xff] 0.0
          %347 = vst [vmem:[#allocation2 + $0x8] sm:$0xff] 0.0
          %348 = vst [vmem:[#allocation2 + $0x10] sm:$0xff] 0.0
          %349 = vst [vmem:[#allocation2 + $0x18] sm:$0xff] 0.0
          %350 = vst [vmem:[#allocation2 + $0x20] sm:$0xff] 0.0
          %351 = vst [vmem:[#allocation2 + $0x28] sm:$0xff] 0.0
          %352 = vst [vmem:[#allocation2 + $0x30] sm:$0xff] 0.0
          %353 = vst [vmem:[#allocation2 + $0x38] sm:$0xff] 0.0
          %354 = vst [vmem:[#allocation2 + $0x40] sm:$0xff] 0.0
          %355 = vst [vmem:[#allocation2 + $0x48] sm:$0xff] 0.0
          %356 = vst [vmem:[#allocation2 + $0x50] sm:$0xff] 0.0
          %357 = vst [vmem:[#allocation2 + $0x58] sm:$0xff] 0.0
          %358 = vst [vmem:[#allocation2 + $0x60] sm:$0xff] 0.0
          %359 = vst [vmem:[#allocation2 + $0x68] sm:$0xff] 0.0
          %360 = vst [vmem:[#allocation2 + $0x70] sm:$0xff] 0.0
          %361 = vst [vmem:[#allocation2 + $0x78] sm:$0xff] 0.0
        $region81: #{gcn_forward.2} parent=72 // pred_fallthru
          _
        %v362 = vld [vmem:[#allocation2] sm:$0xff]
        %v363 = vld [vmem:[#allocation2 + $0x8] sm:$0xff]
        %v364 = vld [vmem:[#allocation2 + $0x10] sm:$0xff]
        %v365 = vld [vmem:[#allocation2 + $0x18] sm:$0xff]
        %v366 = vld [vmem:[#allocation2 + $0x20] sm:$0xff]
        %v367 = vld [vmem:[#allocation2 + $0x28] sm:$0xff]
        %v368 = vld [vmem:[#allocation2 + $0x30] sm:$0xff]
        %v369 = vld [vmem:[#allocation2 + $0x38] sm:$0xff]
        %v370 = vld [vmem:[#allocation2 + $0x40] sm:$0xff]
        %v371 = vld [vmem:[#allocation2 + $0x48] sm:$0xff]
        %v372 = vld [vmem:[#allocation2 + $0x50] sm:$0xff]
        %v373 = vld [vmem:[#allocation2 + $0x58] sm:$0xff]
        %v374 = vld [vmem:[#allocation2 + $0x60] sm:$0xff]
        %v375 = vld [vmem:[#allocation2 + $0x68] sm:$0xff]
        %v376 = vld [vmem:[#allocation2 + $0x70] sm:$0xff]
        %v377 = vld [vmem:[#allocation2 + $0x78] sm:$0xff]
        %v378 = vld [vmem:[%s301] sm:$0xf]
        %v379 = vld [vmem:[%s301 + $0x4] sm:$0xf]
        %v380 = vld [vmem:[%s301 + $0x8] sm:$0xf]
        %v381 = vld [vmem:[%s301 + $0xc] sm:$0xf]
        %v382 = vld [vmem:[%s301 + $0x10] sm:$0xf]
        %v383 = vld [vmem:[%s301 + $0x14] sm:$0xf]
        %v384 = vld [vmem:[%s301 + $0x18] sm:$0xf]
        %v385 = vld [vmem:[%s301 + $0x1c] sm:$0xf]
        %v386 = vld [vmem:[%s301 + $0x20] sm:$0xf]
        %v387 = vld [vmem:[%s301 + $0x24] sm:$0xf]
        %v388 = vld [vmem:[%s301 + $0x28] sm:$0xf]
        %v389 = vld [vmem:[%s301 + $0x2c] sm:$0xf]
        %v390 = vld [vmem:[%s301 + $0x30] sm:$0xf]
        %v391 = vld [vmem:[%s301 + $0x34] sm:$0xf]
        %v392 = vld [vmem:[%s301 + $0x38] sm:$0xf]
        %v393 = vld [vmem:[%s301 + $0x3c] sm:$0xf]
        %v394 = vld [vmem:[%s334] sm:$0xf]
        %v395 = vld [vmem:[%s334 + $0x4] sm:$0xf]
        %v396 = vld [vmem:[%s334 + $0x8] sm:$0xf]
        %v397 = vld [vmem:[%s334 + $0xc] sm:$0xf]
        %v398 = vld [vmem:[%s334 + $0x10] sm:$0xf]
        %v399 = vld [vmem:[%s334 + $0x14] sm:$0xf]
        %v400 = vld [vmem:[%s334 + $0x18] sm:$0xf]
        %v401 = vld [vmem:[%s334 + $0x1c] sm:$0xf]
        %v402 = vld [vmem:[%s334 + $0x20] sm:$0xf]
        %v403 = vld [vmem:[%s334 + $0x24] sm:$0xf]
        %v404 = vld [vmem:[%s334 + $0x28] sm:$0xf]
        %v405 = vld [vmem:[%s334 + $0x2c] sm:$0xf]
        %v406 = vld [vmem:[%s334 + $0x30] sm:$0xf]
        %v407 = vld [vmem:[%s334 + $0x34] sm:$0xf]
        %v408 = vld [vmem:[%s334 + $0x38] sm:$0xf]
        %v409 = vld [vmem:[%s334 + $0x3c] sm:$0xf]
        %v426 = vunpack.c.l.b16 %v378
        %v427 = vunpack.c.l.b16 %v379
        %v428 = vunpack.c.l.b16 %v380
        %v429 = vunpack.c.l.b16 %v381
        %v430 = vunpack.c.l.b16 %v382
        %v431 = vunpack.c.l.b16 %v383
        %v432 = vunpack.c.l.b16 %v384
        %v433 = vunpack.c.l.b16 %v385
        %v434 = vunpack.c.l.b16 %v386
        %v435 = vunpack.c.l.b16 %v387
        %v436 = vunpack.c.l.b16 %v388
        %v437 = vunpack.c.l.b16 %v389
        %v438 = vunpack.c.l.b16 %v390
        %v439 = vunpack.c.l.b16 %v391
        %v440 = vunpack.c.l.b16 %v392
        %v441 = vunpack.c.l.b16 %v393
        %v442 = vpack.c.b16 %v427, %v426
        %v443 = vpack.c.b16 %v429, %v428
        %v444 = vpack.c.b16 %v431, %v430
        %v445 = vpack.c.b16 %v433, %v432
        %v446 = vpack.c.b16 %v435, %v434
        %v447 = vpack.c.b16 %v437, %v436
        %v448 = vpack.c.b16 %v439, %v438
        %v449 = vpack.c.b16 %v441, %v440
        %v474 = vunpack.c.l.b16 %v394
        %v475 = vunpack.c.l.b16 %v395
        %v476 = vunpack.c.l.b16 %v396
        %v477 = vunpack.c.l.b16 %v397
        %v478 = vunpack.c.l.b16 %v398
        %v479 = vunpack.c.l.b16 %v399
        %v480 = vunpack.c.l.b16 %v400
        %v481 = vunpack.c.l.b16 %v401
        %v482 = vunpack.c.l.b16 %v402
        %v483 = vunpack.c.l.b16 %v403
        %v484 = vunpack.c.l.b16 %v404
        %v485 = vunpack.c.l.b16 %v405
        %v486 = vunpack.c.l.b16 %v406
        %v487 = vunpack.c.l.b16 %v407
        %v488 = vunpack.c.l.b16 %v408
        %v489 = vunpack.c.l.b16 %v409
        %v490 = vpack.c.b16 %v475, %v474
        %v491 = vpack.c.b16 %v477, %v476
        %v492 = vpack.c.b16 %v479, %v478
        %v493 = vpack.c.b16 %v481, %v480
        %v494 = vpack.c.b16 %v483, %v482
        %v495 = vpack.c.b16 %v485, %v484
        %v496 = vpack.c.b16 %v487, %v486
        %v497 = vpack.c.b16 %v489, %v488
        %506 = vmatpush.bf16.msra.mxu0 %v497
        %507 = vmatpush.bf16.msra.mxu0 %v496
        %508 = vmatpush.bf16.msra.mxu0 %v495
        %509 = vmatpush.bf16.msra.mxu0 %v494
        %510 = vmatpush.bf16.msra.mxu0 %v493
        %511 = vmatpush.bf16.msra.mxu0 %v492
        %512 = vmatpush.bf16.msra.mxu0 %v491
        %513 = vmatpush.bf16.msra.mxu0 %v490
        %514 = vmatmul.bf16.gmra.mxu0 %v442
        %v515 = vpop.f32.mrf.mxu0
        %v516 = vadd.f32 0.0, %v515
        %v517 = vpop.f32.mrf.mxu0
        %v518 = vadd.f32 0.0, %v517
        %519 = vmatmul.bf16.gmra.mxu0 %v443
        %v520 = vpop.f32.mrf.mxu0
        %v521 = vadd.f32 0.0, %v520
        %v522 = vpop.f32.mrf.mxu0
        %v523 = vadd.f32 0.0, %v522
        %524 = vmatmul.bf16.gmra.mxu0 %v444
        %v525 = vpop.f32.mrf.mxu0
        %v526 = vadd.f32 0.0, %v525
        %v527 = vpop.f32.mrf.mxu0
        %v528 = vadd.f32 0.0, %v527
        %529 = vmatmul.bf16.gmra.mxu0 %v445
        %v530 = vpop.f32.mrf.mxu0
        %v531 = vadd.f32 0.0, %v530
        %v532 = vpop.f32.mrf.mxu0
        %v533 = vadd.f32 0.0, %v532
        %534 = vmatmul.bf16.gmra.mxu0 %v446
        %v535 = vpop.f32.mrf.mxu0
        %v536 = vadd.f32 0.0, %v535
        %v537 = vpop.f32.mrf.mxu0
        %v538 = vadd.f32 0.0, %v537
        %539 = vmatmul.bf16.gmra.mxu0 %v447
        %v540 = vpop.f32.mrf.mxu0
        %v541 = vadd.f32 0.0, %v540
        %v542 = vpop.f32.mrf.mxu0
        %v543 = vadd.f32 0.0, %v542
        %544 = vmatmul.bf16.gmra.mxu0 %v448
        %v545 = vpop.f32.mrf.mxu0
        %v546 = vadd.f32 0.0, %v545
        %v547 = vpop.f32.mrf.mxu0
        %v548 = vadd.f32 0.0, %v547
        %549 = vmatmul.bf16.gmra.mxu0 %v449
        %v550 = vpop.f32.mrf.mxu0
        %v551 = vadd.f32 0.0, %v550
        %v552 = vpop.f32.mrf.mxu0
        %v553 = vadd.f32 0.0, %v552
        %554 = vdwg.mxu0
        %v555 = vadd.f32 %v362, %v516
        %v556 = vadd.f32 %v363, %v518
        %v557 = vadd.f32 %v364, %v521
        %v558 = vadd.f32 %v365, %v523
        %v559 = vadd.f32 %v366, %v526
        %v560 = vadd.f32 %v367, %v528
        %v561 = vadd.f32 %v368, %v531
        %v562 = vadd.f32 %v369, %v533
        %v563 = vadd.f32 %v370, %v536
        %v564 = vadd.f32 %v371, %v538
        %v565 = vadd.f32 %v372, %v541
        %v566 = vadd.f32 %v373, %v543
        %v567 = vadd.f32 %v374, %v546
        %v568 = vadd.f32 %v375, %v548
        %v569 = vadd.f32 %v376, %v551
        %v570 = vadd.f32 %v377, %v553
        %571 = vst [vmem:[#allocation2] sm:$0xff] %v555
        %572 = vst [vmem:[#allocation2 + $0x8] sm:$0xff] %v556
        %573 = vst [vmem:[#allocation2 + $0x10] sm:$0xff] %v557
        %574 = vst [vmem:[#allocation2 + $0x18] sm:$0xff] %v558
        %575 = vst [vmem:[#allocation2 + $0x20] sm:$0xff] %v559
        %576 = vst [vmem:[#allocation2 + $0x28] sm:$0xff] %v560
        %577 = vst [vmem:[#allocation2 + $0x30] sm:$0xff] %v561
        %578 = vst [vmem:[#allocation2 + $0x38] sm:$0xff] %v562
        %579 = vst [vmem:[#allocation2 + $0x40] sm:$0xff] %v563
        %580 = vst [vmem:[#allocation2 + $0x48] sm:$0xff] %v564
        %581 = vst [vmem:[#allocation2 + $0x50] sm:$0xff] %v565
        %582 = vst [vmem:[#allocation2 + $0x58] sm:$0xff] %v566
        %583 = vst [vmem:[#allocation2 + $0x60] sm:$0xff] %v567
        %584 = vst [vmem:[#allocation2 + $0x68] sm:$0xff] %v568
        %585 = vst [vmem:[#allocation2 + $0x70] sm:$0xff] %v569
        %586 = vst [vmem:[#allocation2 + $0x78] sm:$0xff] %v570
        %p587 = scmp.eq.s32.totalorder %s20, 3
        // Predicated region
        $region82: #{gcn_forward.2} parent=72 // pred_check
          %p588 = pneg %p587
        $region83: #{gcn_forward.2} parent=72 // pred_check_branch
          %590 = sbr.rel (%p588) target = $region85
        $region84: #{gcn_forward.2} parent=72 // pred_region
          %v591 = vld [vmem:[#allocation2] sm:$0xff]
          %v592 = vld [vmem:[#allocation2 + $0x8] sm:$0xff]
          %v593 = vld [vmem:[#allocation2 + $0x10] sm:$0xff]
          %v594 = vld [vmem:[#allocation2 + $0x18] sm:$0xff]
          %v595 = vld [vmem:[#allocation2 + $0x20] sm:$0xff]
          %v596 = vld [vmem:[#allocation2 + $0x28] sm:$0xff]
          %v597 = vld [vmem:[#allocation2 + $0x30] sm:$0xff]
          %v598 = vld [vmem:[#allocation2 + $0x38] sm:$0xff]
          %v599 = vld [vmem:[#allocation2 + $0x40] sm:$0xff]
          %v600 = vld [vmem:[#allocation2 + $0x48] sm:$0xff]
          %v601 = vld [vmem:[#allocation2 + $0x50] sm:$0xff]
          %v602 = vld [vmem:[#allocation2 + $0x58] sm:$0xff]
          %v603 = vld [vmem:[#allocation2 + $0x60] sm:$0xff]
          %v604 = vld [vmem:[#allocation2 + $0x68] sm:$0xff]
          %v605 = vld [vmem:[#allocation2 + $0x70] sm:$0xff]
          %v606 = vld [vmem:[#allocation2 + $0x78] sm:$0xff]
          %v607 = vld [vmem:[%s2] sm:$0xff]
          %v608 = vld [vmem:[%s2 + $0x8] sm:$0xff]
          %v609 = vld [vmem:[%s2 + $0x10] sm:$0xff]
          %v610 = vld [vmem:[%s2 + $0x18] sm:$0xff]
          %v611 = vld [vmem:[%s2 + $0x20] sm:$0xff]
          %v612 = vld [vmem:[%s2 + $0x28] sm:$0xff]
          %v613 = vld [vmem:[%s2 + $0x30] sm:$0xff]
          %v614 = vld [vmem:[%s2 + $0x38] sm:$0xff]
          %v615 = vld [vmem:[%s2 + $0x40] sm:$0xff]
          %v616 = vld [vmem:[%s2 + $0x48] sm:$0xff]
          %v617 = vld [vmem:[%s2 + $0x50] sm:$0xff]
          %v618 = vld [vmem:[%s2 + $0x58] sm:$0xff]
          %v619 = vld [vmem:[%s2 + $0x60] sm:$0xff]
          %v620 = vld [vmem:[%s2 + $0x68] sm:$0xff]
          %v621 = vld [vmem:[%s2 + $0x70] sm:$0xff]
          %v622 = vld [vmem:[%s2 + $0x78] sm:$0xff]
          %v623 = vld [vmem:[%s3] sm:$0x1]
          %v625 = vperm.slane %v623, 0
          %627 = vmatpush.msra.mxu0 %v622
          %628 = vmatpush.msra.mxu0 %v621
          %629 = vmatpush.msra.mxu0 %v620
          %630 = vmatpush.msra.mxu0 %v619
          %631 = vmatpush.msra.mxu0 %v618
          %632 = vmatpush.msra.mxu0 %v617
          %633 = vmatpush.msra.mxu0 %v616
          %634 = vmatpush.msra.mxu0 %v615
          %635 = vmatpush.msra.mxu0 %v614
          %636 = vmatpush.msra.mxu0 %v613
          %637 = vmatpush.msra.mxu0 %v612
          %638 = vmatpush.msra.mxu0 %v611
          %639 = vmatpush.msra.mxu0 %v610
          %640 = vmatpush.msra.mxu0 %v609
          %641 = vmatpush.msra.mxu0 %v608
          %642 = vmatpush.msra.mxu0 %v607
          %643 = vmatmul.f32.gmra.mxu0 %v591
          %v644 = vpop.f32.mrf.mxu0
          %v645 = vadd.f32 %v625, %v644
          %646 = vmatmul.f32.gmra.mxu0 %v592
          %v647 = vpop.f32.mrf.mxu0
          %v648 = vadd.f32 %v625, %v647
          %649 = vmatmul.f32.gmra.mxu0 %v593
          %v650 = vpop.f32.mrf.mxu0
          %v651 = vadd.f32 %v625, %v650
          %652 = vmatmul.f32.gmra.mxu0 %v594
          %v653 = vpop.f32.mrf.mxu0
          %v654 = vadd.f32 %v625, %v653
          %655 = vmatmul.f32.gmra.mxu0 %v595
          %v656 = vpop.f32.mrf.mxu0
          %v657 = vadd.f32 %v625, %v656
          %658 = vmatmul.f32.gmra.mxu0 %v596
          %v659 = vpop.f32.mrf.mxu0
          %v660 = vadd.f32 %v625, %v659
          %661 = vmatmul.f32.gmra.mxu0 %v597
          %v662 = vpop.f32.mrf.mxu0
          %v663 = vadd.f32 %v625, %v662
          %664 = vmatmul.f32.gmra.mxu0 %v598
          %v665 = vpop.f32.mrf.mxu0
          %v666 = vadd.f32 %v625, %v665
          %667 = vmatmul.f32.gmra.mxu0 %v599
          %v668 = vpop.f32.mrf.mxu0
          %v669 = vadd.f32 %v625, %v668
          %670 = vmatmul.f32.gmra.mxu0 %v600
          %v671 = vpop.f32.mrf.mxu0
          %v672 = vadd.f32 %v625, %v671
          %673 = vmatmul.f32.gmra.mxu0 %v601
          %v674 = vpop.f32.mrf.mxu0
          %v675 = vadd.f32 %v625, %v674
          %676 = vmatmul.f32.gmra.mxu0 %v602
          %v677 = vpop.f32.mrf.mxu0
          %v678 = vadd.f32 %v625, %v677
          %679 = vmatmul.f32.gmra.mxu0 %v603
          %v680 = vpop.f32.mrf.mxu0
          %v681 = vadd.f32 %v625, %v680
          %682 = vmatmul.f32.gmra.mxu0 %v604
          %v683 = vpop.f32.mrf.mxu0
          %v684 = vadd.f32 %v625, %v683
          %685 = vmatmul.f32.gmra.mxu0 %v605
          %v686 = vpop.f32.mrf.mxu0
          %v687 = vadd.f32 %v625, %v686
          %688 = vmatmul.f32.gmra.mxu0 %v606
          %v689 = vpop.f32.mrf.mxu0
          %v690 = vadd.f32 %v625, %v689
          %691 = vdwg.mxu0
          %v692 = vmax.f32 %v645, 0.0
          %v693 = vmax.f32 %v648, 0.0
          %v694 = vmax.f32 %v651, 0.0
          %v695 = vmax.f32 %v654, 0.0
          %v696 = vmax.f32 %v657, 0.0
          %v697 = vmax.f32 %v660, 0.0
          %v698 = vmax.f32 %v663, 0.0
          %v699 = vmax.f32 %v666, 0.0
          %v700 = vmax.f32 %v669, 0.0
          %v701 = vmax.f32 %v672, 0.0
          %v702 = vmax.f32 %v675, 0.0
          %v703 = vmax.f32 %v678, 0.0
          %v704 = vmax.f32 %v681, 0.0
          %v705 = vmax.f32 %v684, 0.0
          %v706 = vmax.f32 %v687, 0.0
          %v707 = vmax.f32 %v690, 0.0
          %v708 = vpack.c.bf16 %v692, %v692
          %v709 = vpack.c.bf16 %v693, %v693
          %v710 = vpack.c.bf16 %v694, %v694
          %v711 = vpack.c.bf16 %v695, %v695
          %v712 = vpack.c.bf16 %v696, %v696
          %v713 = vpack.c.bf16 %v697, %v697
          %v714 = vpack.c.bf16 %v698, %v698
          %v715 = vpack.c.bf16 %v699, %v699
          %v716 = vpack.c.bf16 %v700, %v700
          %v717 = vpack.c.bf16 %v701, %v701
          %v718 = vpack.c.bf16 %v702, %v702
          %v719 = vpack.c.bf16 %v703, %v703
          %v720 = vpack.c.bf16 %v704, %v704
          %v721 = vpack.c.bf16 %v705, %v705
          %v722 = vpack.c.bf16 %v706, %v706
          %v723 = vpack.c.bf16 %v707, %v707
          %724 = vst [vmem:[%s340] sm:$0xf] %v708
          %725 = vst [vmem:[%s340 + $0x4] sm:$0xf] %v709
          %726 = vst [vmem:[%s340 + $0x8] sm:$0xf] %v710
          %727 = vst [vmem:[%s340 + $0xc] sm:$0xf] %v711
          %728 = vst [vmem:[%s340 + $0x10] sm:$0xf] %v712
          %729 = vst [vmem:[%s340 + $0x14] sm:$0xf] %v713
          %730 = vst [vmem:[%s340 + $0x18] sm:$0xf] %v714
          %731 = vst [vmem:[%s340 + $0x1c] sm:$0xf] %v715
          %732 = vst [vmem:[%s340 + $0x20] sm:$0xf] %v716
          %733 = vst [vmem:[%s340 + $0x24] sm:$0xf] %v717
          %734 = vst [vmem:[%s340 + $0x28] sm:$0xf] %v718
          %735 = vst [vmem:[%s340 + $0x2c] sm:$0xf] %v719
          %736 = vst [vmem:[%s340 + $0x30] sm:$0xf] %v720
          %737 = vst [vmem:[%s340 + $0x34] sm:$0xf] %v721
          %738 = vst [vmem:[%s340 + $0x38] sm:$0xf] %v722
          %739 = vst [vmem:[%s340 + $0x3c] sm:$0xf] %v723
        $region85: #{gcn_forward.2} parent=72 // pred_fallthru
          _
        %s740 = smul.u32 16, %s19
        %p741 = scmp.lt.s32.totalorder %s740, 63
        %s742 = scalar_select %p741, %s740, 63
        %s743 = smul.addr %s742, 4
        %s744 = scalar_lea.vmem %s4, %s743
        // Predicated region
        $region86: #{gcn_forward.2} parent=72 // pred_check
          %p745 = pneg %p141
        $region87: #{gcn_forward.2} parent=72 // pred_check_branch
          %747 = sbr.rel (%p745) target = $region89
        $region88: #{gcn_forward.2} parent=72 // pred_region
          %s748 = smul.u32 16, %s19
        $region89: #{gcn_forward.2} parent=72 // pred_fallthru
          _
      $region73: #{gcn_forward.2} parent=5 // pred_fallthru
        _
      %p749 = scmp.le.s32.totalorder 2, %s10
      // Predicated region
      $region90: #{gcn_forward.2} parent=5 // pred_check
        %p750 = pneg %p749
      $region91: #{gcn_forward.2} parent=5 // pred_check_branch
        %752 = sbr.rel (%p750) target = $region93
      $region92: #{gcn_forward.2} parent=5 // pred_region
        %s753 = ssub.s32 %s10, 2
        // Predicated region
        $region94: #{gcn_forward.2} parent=92 // pred_check
          %p754 = pneg %p147
        $region95: #{gcn_forward.2} parent=92 // pred_check_branch
          %756 = sbr.rel (%p754) target = $region97
        $region96: #{gcn_forward.2} parent=92 // pred_region
          %s757 = smul.u32 16, %s21
          %p758 = scmp.lt.s32.totalorder %s757, 63
          %s759 = scalar_select %p758, %s757, 63
          %s760 = smul.addr %s759, 4
          %s761 = scalar_lea.vmem %s4, %s760
        $region97: #{gcn_forward.2} parent=92 // pred_fallthru
          _
      $region93: #{gcn_forward.2} parent=5 // pred_fallthru
        _
    $region6: #{gcn_forward.2} parent=1 // loop_footer
      %s14 = sadd.s32 1, %s10
    $region7: #{gcn_forward.2} parent=1 // loop_footer_branch
      %9 = sbr.rel target = $region3
    $region8: #{gcn_forward.2} parent=1 // loop_exit
      _

// kernel: gcn_forward.3
$region0: #{gcn_forward.3}
  #allocation0 [shape = 'u32[]', space=smem, size = 0x4, offset = 0x4, fixed_abs, tag = 'smem constant byte address 0x4 - core index']
  #allocation1 [shape = 'u32[72,128]{1,0:T(1,128)}', space=vmem, size = 0x9000, scoped, tag = 'internal scratch']
  #allocation2 [shape = 'f32[128,128]{1,0:T(8,128)}', space=vmem, size = 0x10000, scoped, tag = 'scratch operand']
  %s0 = inlined_call_operand.vmem [shape: bf16[512,512], index: 0, kind: input, shape index: {}]
  %s1 = inlined_call_operand.vmem [shape: bf16[512,128], index: 1, kind: input, shape index: {}]
  %s2 = inlined_call_operand.vmem [shape: f32[128,128], index: 2, kind: input, shape index: {}]
  %s3 = inlined_call_operand.vmem [shape: f32[1,128], index: 3, kind: input, shape index: {}]
  %s4 = inlined_call_operand.vmem [shape: f32[512,128], index: 4, kind: output, shape index: {}]
  %s5 = sld [smem:[#allocation0]]
  $region98: #{gcn_forward.3} parent=0
    _
  %s7 = ssub.s32 1, %s5
  %s8 = scalar_select 0, %s7, %s5
  $region1: #{gcn_forward.3} parent=0
    #allocation3 [shape = 'u8[65536]{0}', space=vmem, size = 0x10000, scoped, tag = 'input window, operand 0']
    loop: start=0, step=1, limit=18
    $region2: #{gcn_forward.3} parent=1 // loop_pre_header
      _
    $region3: #{gcn_forward.3} parent=1 // loop_header
      %s10 = sphi 0, %s14
      %p11 = scmp.ge.s32.totalorder %s10, 18
      %s17 = sphi 0, %s29
      %s18 = sphi 0, %s25
      %s19 = sphi 0, %s17
      %s20 = sphi 0, %s18
      %s21 = sphi 0, %s19
      %s22 = sphi 0, %s20
      %s34 = sphi 0, %s36
      %s37 = sphi 0, %s34
      %s38 = sphi 0, %s37
      %s54 = sphi 0, %s38
      %s60 = sphi 0, %s62
      %s63 = sphi 0, %s60
      %s64 = sphi 0, %s63
      %s80 = sphi 0, %s64
      %s84 = sphi 0, %s84
      %s86 = sphi 0, %s84
      %s87 = sphi 0, %s86
      %s101 = sphi 0, %s87
      %s105 = sphi 0, %s105
      %s107 = sphi 0, %s105
      %s108 = sphi 0, %s107
      %s122 = sphi 0, %s108
      %s128 = sphi 0, %s130
      %s131 = sphi 0, %s128
      %s132 = sphi 0, %s131
      %s148 = sphi 0, %s132
    $region4: #{gcn_forward.3} parent=1 // loop_header_branch
      %13 = sbr.rel (%p11) target = $region8
    $region5: #{gcn_forward.3} parent=1 // loop_body
      %s15 = ssub.s32 %s10, 1
      %s16 = ssub.s32 %s10, 2
      %s23 = sadd.s32 1, %s18
      %p24 = scmp.ge.s32.totalorder %s23, 4
      %s25 = scalar_select %p24, 0, %s23
      %s26 = sadd.s32 1, %s17
      %s27 = scalar_select %p24, %s26, %s17
      %p28 = scmp.ge.s32.totalorder %s27, 4
      %s29 = scalar_select %p28, 0, %s27
      %s30 = ssub.s32 %s17, %s29
      %s31 = ssub.s32 %s18, %s25
      %s32 = sor.u32 %s30, %s31
      %p33 = scmp.eq.s32.totalorder %s32, 0
      %s35 = sadd.s32 %s34, 1
      %s36 = scalar_select %p33, %s34, %s35
      %p39 = pneg %p33
      %p40 = scmp.eq.s32.totalorder %s10, 15
      %p41 = por %p39, %p40
      %p42 = scmp.ne.s32.totalorder %s34, %s37
      %p43 = scmp.eq.s32.totalorder %s10, 0
      %p44 = por %p42, %p43
      %p45 = scmp.ne.s32.totalorder %s34, %s37
      %p46 = scmp.eq.s32.totalorder %s15, 15
      %p47 = por %p45, %p46
      %p48 = scmp.ne.s32.totalorder %s37, %s38
      %p49 = scmp.eq.s32.totalorder %s15, 0
      %p50 = por %p48, %p49
      %p51 = scmp.ne.s32.totalorder %s37, %s38
      %p52 = scmp.eq.s32.totalorder %s16, 15
      %p53 = por %p51, %p52
      %p55 = scmp.ne.s32.totalorder %s38, %s54
      %p56 = scmp.eq.s32.totalorder %s16, 0
      %p57 = por %p55, %p56
      %s58 = ssub.s32 %s18, %s25
      %p59 = scmp.eq.s32.totalorder %s58, 0
      %s61 = sadd.s32 %s60, 1
      %s62 = scalar_select %p59, %s60, %s61
      %p65 = pneg %p59
      %p66 = scmp.eq.s32.totalorder %s10, 15
      %p67 = por %p65, %p66
      %p68 = scmp.ne.s32.totalorder %s60, %s63
      %p69 = scmp.eq.s32.totalorder %s10, 0
      %p70 = por %p68, %p69
      %p71 = scmp.ne.s32.totalorder %s60, %s63
      %p72 = scmp.eq.s32.totalorder %s15, 15
      %p73 = por %p71, %p72
      %p74 = scmp.ne.s32.totalorder %s63, %s64
      %p75 = scmp.eq.s32.totalorder %s15, 0
      %p76 = por %p74, %p75
      %p77 = scmp.ne.s32.totalorder %s63, %s64
      %p78 = scmp.eq.s32.totalorder %s16, 15
      %p79 = por %p77, %p78
      %p81 = scmp.ne.s32.totalorder %s64, %s80
      %p82 = scmp.eq.s32.totalorder %s16, 0
      %p83 = por %p81, %p82
      %s85 = sadd.s32 %s84, 1
      %p88 = scmp.eq.s32.totalorder %s10, 15
      %p89 = scmp.ne.s32.totalorder %s84, %s86
      %p90 = scmp.eq.s32.totalorder %s10, 0
      %p91 = por %p89, %p90
      %p92 = scmp.ne.s32.totalorder %s84, %s86
      %p93 = scmp.eq.s32.totalorder %s15, 15
      %p94 = por %p92, %p93
      %p95 = scmp.ne.s32.totalorder %s86, %s87
      %p96 = scmp.eq.s32.totalorder %s15, 0
      %p97 = por %p95, %p96
      %p98 = scmp.ne.s32.totalorder %s86, %s87
      %p99 = scmp.eq.s32.totalorder %s16, 15
      %p100 = por %p98, %p99
      %p102 = scmp.ne.s32.totalorder %s87, %s101
      %p103 = scmp.eq.s32.totalorder %s16, 0
      %p104 = por %p102, %p103
      %s106 = sadd.s32 %s105, 1
      %p109 = scmp.eq.s32.totalorder %s10, 15
      %p110 = scmp.ne.s32.totalorder %s105, %s107
      %p111 = scmp.eq.s32.totalorder %s10, 0
      %p112 = por %p110, %p111
      %p113 = scmp.ne.s32.totalorder %s105, %s107
      %p114 = scmp.eq.s32.totalorder %s15, 15
      %p115 = por %p113, %p114
      %p116 = scmp.ne.s32.totalorder %s107, %s108
      %p117 = scmp.eq.s32.totalorder %s15, 0
      %p118 = por %p116, %p117
      %p119 = scmp.ne.s32.totalorder %s107, %s108
      %p120 = scmp.eq.s32.totalorder %s16, 15
      %p121 = por %p119, %p120
      %p123 = scmp.ne.s32.totalorder %s108, %s122
      %p124 = scmp.eq.s32.totalorder %s16, 0
      %p125 = por %p123, %p124
      %s126 = ssub.s32 %s17, %s29
      %p127 = scmp.eq.s32.totalorder %s126, 0
      %s129 = sadd.s32 %s128, 1
      %s130 = scalar_select %p127, %s128, %s129
      %p133 = pneg %p127
      %p134 = scmp.eq.s32.totalorder %s10, 15
      %p135 = por %p133, %p134
      %p136 = scmp.ne.s32.totalorder %s128, %s131
      %p137 = scmp.eq.s32.totalorder %s10, 0
      %p138 = por %p136, %p137
      %p139 = scmp.ne.s32.totalorder %s128, %s131
      %p140 = scmp.eq.s32.totalorder %s15, 15
      %p141 = por %p139, %p140
      %p142 = scmp.ne.s32.totalorder %s131, %s132
      %p143 = scmp.eq.s32.totalorder %s15, 0
      %p144 = por %p142, %p143
      %p145 = scmp.ne.s32.totalorder %s131, %s132
      %p146 = scmp.eq.s32.totalorder %s16, 15
      %p147 = por %p145, %p146
      %p149 = scmp.ne.s32.totalorder %s132, %s148
      %p150 = scmp.eq.s32.totalorder %s16, 0
      %p151 = por %p149, %p150
      %p152 = scmp.le.s32.totalorder 1, %s10
      %p153 = scmp.lt.s32.totalorder %s10, 17
      %p154 = pnand %p152, %p153
      %p155 = pneg %p154
      // Predicated region
      $region9: #{gcn_forward.3} parent=5 // pred_check
        _
      $region10: #{gcn_forward.3} parent=5 // pred_check_branch
        %157 = sbr.rel (%p154) target = $region12
      $region11: #{gcn_forward.3} parent=5 // pred_region
        %s158 = ssub.s32 %s10, 1
        // Predicated region
        $region13: #{gcn_forward.3} parent=11 // pred_check
          %p159 = pneg %p97
        $region14: #{gcn_forward.3} parent=11 // pred_check_branch
          %161 = sbr.rel (%p159) target = $region16
        $region15: #{gcn_forward.3} parent=11 // pred_region
          _
        $region16: #{gcn_forward.3} parent=11 // pred_fallthru
          _
        // Predicated region
        $region17: #{gcn_forward.3} parent=11 // pred_check
          %p162 = pneg %p118
        $region18: #{gcn_forward.3} parent=11 // pred_check_branch
          %164 = sbr.rel (%p162) target = $region20
        $region19: #{gcn_forward.3} parent=11 // pred_region
          _
        $region20: #{gcn_forward.3} parent=11 // pred_fallthru
          _
      $region12: #{gcn_forward.3} parent=5 // pred_fallthru
        _
      %p165 = scmp.lt.s32.totalorder %s10, 16
      // Predicated region
      $region21: #{gcn_forward.3} parent=5 // pred_check
        %p166 = pneg %p165
      $region22: #{gcn_forward.3} parent=5 // pred_check_branch
        %168 = sbr.rel (%p166) target = $region24
      $region23: #{gcn_forward.3} parent=5 // pred_region
        // Predicated region
        $region25: #{gcn_forward.3} parent=23 // pred_check
          %p169 = pneg %p44
        $region26: #{gcn_forward.3} parent=23 // pred_check_branch
          %171 = sbr.rel (%p169) target = $region28
        $region27: #{gcn_forward.3} parent=23 // pred_region
          %s172 = sand.u32 %s34, 1
          %s173 = sand.u32 %s34, 1
          %s174 = smul.addr %s173, 64
          %s175 = scalar_lea.vmem [#allocation3], %s174
          %s176 = smul.u32 16, %s17
          %s177 = smul.addr %s176, 4
          %s178 = sadd.s32 %s18, %s177
          %s179 = smul.addr %s178, 4
          %s180 = scalar_lea.vmem %s0, %s179
          // Predicated region
          $region29: #{gcn_forward.3} parent=27 // pred_check
            _
          $region30: #{gcn_forward.3} parent=27 // pred_check_branch
            %182 = sbr.rel (0) target = $region32
          $region31: #{gcn_forward.3} parent=27 // pred_region
            // Predicated region
            $region33: #{gcn_forward.3} parent=31 // pred_check
              _
            $region34: #{gcn_forward.3} parent=31 // pred_check_branch
              %184 = sbr.rel target = $region36
            $region35: #{gcn_forward.3} parent=31 // pred_region
              // Predicated region
              $region48: #{gcn_forward.3} parent=35 // pred_check
                _
              $region49: #{gcn_forward.3} parent=35 // pred_check_branch
                %230 = sbr.rel (0) target = $region51
              $region50: #{gcn_forward.3} parent=35 // pred_region
                loop: start=0, step=1, limit=1
                $region52: #{gcn_forward.3} parent=50 // loop_pre_header
                  _
                $region53: #{gcn_forward.3} parent=50 // loop_header
                  %s232 = sphi 0, %s236
                  %p233 = scmp.ge.s32.totalorder %s232, 1
                  %s237 = sphi %s180, %s180
                  %s238 = sphi %s175, %s175
                $region54: #{gcn_forward.3} parent=50 // loop_header_branch
                  %235 = sbr.rel (%p233) target = $region58
                $region55: #{gcn_forward.3} parent=50 // loop_body
                  _
                $region56: #{gcn_forward.3} parent=50 // loop_footer
                  %s236 = sadd.s32 1, %s232
                $region57: #{gcn_forward.3} parent=50 // loop_footer_branch
                  %231 = sbr.rel target = $region53
                $region58: #{gcn_forward.3} parent=50 // loop_exit
                  _
                %s240 = ssub.s32 16, 1
                loop: start=0, step=1, limit=1
                $region59: #{gcn_forward.3} parent=50 // loop_pre_header
                  _
                $region60: #{gcn_forward.3} parent=50 // loop_header
                  %s242 = sphi 0, %s246
                  %p243 = scmp.ge.s32.totalorder %s242, 1
                  %s247 = sphi %s180, %s180
                  %s248 = sphi %s175, %s175
                $region61: #{gcn_forward.3} parent=50 // loop_header_branch
                  %245 = sbr.rel (%p243) target = $region65
                $region62: #{gcn_forward.3} parent=50 // loop_body
                  %v249 = vld [vmem:[%s247] sm:%s240]
                  %250 = vst [vmem:[%s248] sm:%s240] %v249
                  %v251 = vld [vmem:[%s247 + $0x10] sm:%s240]
                  %252 = vst [vmem:[%s248 + $0x4] sm:%s240] %v251
                  %v253 = vld [vmem:[%s247 + $0x20] sm:%s240]
                  %254 = vst [vmem:[%s248 + $0x8] sm:%s240] %v253
                  %v255 = vld [vmem:[%s247 + $0x30] sm:%s240]
                  %256 = vst [vmem:[%s248 + $0xc] sm:%s240] %v255
                  %v257 = vld [vmem:[%s247 + $0x40] sm:%s240]
                  %258 = vst [vmem:[%s248 + $0x10] sm:%s240] %v257
                  %v259 = vld [vmem:[%s247 + $0x50] sm:%s240]
                  %260 = vst [vmem:[%s248 + $0x14] sm:%s240] %v259
                  %v261 = vld [vmem:[%s247 + $0x60] sm:%s240]
                  %262 = vst [vmem:[%s248 + $0x18] sm:%s240] %v261
                  %v263 = vld [vmem:[%s247 + $0x70] sm:%s240]
                  %264 = vst [vmem:[%s248 + $0x1c] sm:%s240] %v263
                  %v265 = vld [vmem:[%s247 + $0x80] sm:%s240]
                  %266 = vst [vmem:[%s248 + $0x20] sm:%s240] %v265
                  %v267 = vld [vmem:[%s247 + $0x90] sm:%s240]
                  %268 = vst [vmem:[%s248 + $0x24] sm:%s240] %v267
                  %v269 = vld [vmem:[%s247 + $0xa0] sm:%s240]
                  %270 = vst [vmem:[%s248 + $0x28] sm:%s240] %v269
                  %v271 = vld [vmem:[%s247 + $0xb0] sm:%s240]
                  %272 = vst [vmem:[%s248 + $0x2c] sm:%s240] %v271
                  %v273 = vld [vmem:[%s247 + $0xc0] sm:%s240]
                  %274 = vst [vmem:[%s248 + $0x30] sm:%s240] %v273
                  %v275 = vld [vmem:[%s247 + $0xd0] sm:%s240]
                  %276 = vst [vmem:[%s248 + $0x34] sm:%s240] %v275
                  %v277 = vld [vmem:[%s247 + $0xe0] sm:%s240]
                  %278 = vst [vmem:[%s248 + $0x38] sm:%s240] %v277
                  %v279 = vld [vmem:[%s247 + $0xf0] sm:%s240]
                  %280 = vst [vmem:[%s248 + $0x3c] sm:%s240] %v279
                $region63: #{gcn_forward.3} parent=50 // loop_footer
                  %s246 = sadd.s32 1, %s242
                $region64: #{gcn_forward.3} parent=50 // loop_footer_branch
                  %241 = sbr.rel target = $region60
                $region65: #{gcn_forward.3} parent=50 // loop_exit
                  _
              $region51: #{gcn_forward.3} parent=35 // pred_fallthru
                _
            $region36: #{gcn_forward.3} parent=31 // pred_fallthru
              _
            // Predicated region
            $region37: #{gcn_forward.3} parent=31 // pred_check
              _
            $region38: #{gcn_forward.3} parent=31 // pred_check_branch
              %186 = sbr.rel (0) target = $region40
            $region39: #{gcn_forward.3} parent=31 // pred_region
              %s188 = ssub.s32 16, 1
              loop: start=0, step=1, limit=1
              $region41: #{gcn_forward.3} parent=39 // loop_pre_header
                _
              $region42: #{gcn_forward.3} parent=39 // loop_header
                %s190 = sphi 0, %s194
                %p191 = scmp.ge.s32.totalorder %s190, 1
                %s195 = sphi %s180, %s180
                %s196 = sphi %s175, %s175
              $region43: #{gcn_forward.3} parent=39 // loop_header_branch
                %193 = sbr.rel (%p191) target = $region47
              $region44: #{gcn_forward.3} parent=39 // loop_body
                %v197 = vld [vmem:[%s195] sm:%s188]
                %198 = vst [vmem:[%s196] sm:%s188] %v197
                %v199 = vld [vmem:[%s195 + $0x10] sm:%s188]
                %200 = vst [vmem:[%s196 + $0x4] sm:%s188] %v199
                %v201 = vld [vmem:[%s195 + $0x20] sm:%s188]
                %202 = vst [vmem:[%s196 + $0x8] sm:%s188] %v201
                %v203 = vld [vmem:[%s195 + $0x30] sm:%s188]
                %204 = vst [vmem:[%s196 + $0xc] sm:%s188] %v203
                %v205 = vld [vmem:[%s195 + $0x40] sm:%s188]
                %206 = vst [vmem:[%s196 + $0x10] sm:%s188] %v205
                %v207 = vld [vmem:[%s195 + $0x50] sm:%s188]
                %208 = vst [vmem:[%s196 + $0x14] sm:%s188] %v207
                %v209 = vld [vmem:[%s195 + $0x60] sm:%s188]
                %210 = vst [vmem:[%s196 + $0x18] sm:%s188] %v209
                %v211 = vld [vmem:[%s195 + $0x70] sm:%s188]
                %212 = vst [vmem:[%s196 + $0x1c] sm:%s188] %v211
                %v213 = vld [vmem:[%s195 + $0x80] sm:%s188]
                %214 = vst [vmem:[%s196 + $0x20] sm:%s188] %v213
                %v215 = vld [vmem:[%s195 + $0x90] sm:%s188]
                %216 = vst [vmem:[%s196 + $0x24] sm:%s188] %v215
                %v217 = vld [vmem:[%s195 + $0xa0] sm:%s188]
                %218 = vst [vmem:[%s196 + $0x28] sm:%s188] %v217
                %v219 = vld [vmem:[%s195 + $0xb0] sm:%s188]
                %220 = vst [vmem:[%s196 + $0x2c] sm:%s188] %v219
                %v221 = vld [vmem:[%s195 + $0xc0] sm:%s188]
                %222 = vst [vmem:[%s196 + $0x30] sm:%s188] %v221
                %v223 = vld [vmem:[%s195 + $0xd0] sm:%s188]
                %224 = vst [vmem:[%s196 + $0x34] sm:%s188] %v223
                %v225 = vld [vmem:[%s195 + $0xe0] sm:%s188]
                %226 = vst [vmem:[%s196 + $0x38] sm:%s188] %v225
                %v227 = vld [vmem:[%s195 + $0xf0] sm:%s188]
                %228 = vst [vmem:[%s196 + $0x3c] sm:%s188] %v227
              $region45: #{gcn_forward.3} parent=39 // loop_footer
                %s194 = sadd.s32 1, %s190
              $region46: #{gcn_forward.3} parent=39 // loop_footer_branch
                %189 = sbr.rel target = $region42
              $region47: #{gcn_forward.3} parent=39 // loop_exit
                _
            $region40: #{gcn_forward.3} parent=31 // pred_fallthru
              _
          $region32: #{gcn_forward.3} parent=27 // pred_fallthru
            _
          %281 = vnop
        $region28: #{gcn_forward.3} parent=23 // pred_fallthru
          _
        // Predicated region
        $region66: #{gcn_forward.3} parent=23 // pred_check
          %p282 = pneg %p70
        $region67: #{gcn_forward.3} parent=23 // pred_check_branch
          %284 = sbr.rel (%p282) target = $region69
        $region68: #{gcn_forward.3} parent=23 // pred_region
          %s285 = smul.u32 16, %s18
          %p286 = scmp.lt.s32.totalorder %s285, 63
          %s287 = scalar_select %p286, %s285, 63
          %s288 = smul.addr %s287, 4
          %s289 = scalar_lea.vmem %s1, %s288
          %s290 = smul.u32 16, %s18
        $region69: #{gcn_forward.3} parent=23 // pred_fallthru
          _
      $region24: #{gcn_forward.3} parent=5 // pred_fallthru
        _
      %p291 = scmp.le.s32.totalorder 1, %s10
      %p292 = scmp.lt.s32.totalorder %s10, 17
      %p293 = pnand %p291, %p292
      %p294 = pneg %p293
      // Predicated region
      $region70: #{gcn_forward.3} parent=5 // pred_check
        _
      $region71: #{gcn_forward.3} parent=5 // pred_check_branch
        %296 = sbr.rel (%p293) target = $region73
      $region72: #{gcn_forward.3} parent=5 // pred_region
        %s297 = ssub.s32 %s10, 1
        %s298 = sand.u32 %s37, 1
        %s299 = sand.u32 %s37, 1
        %s300 = smul.addr %s299, 64
        %s301 = scalar_lea.vmem [#allocation3], %s300
        // Predicated region
        $region74: #{gcn_forward.3} parent=72 // pred_check
          %p302 = pneg %p50
        $region75: #{gcn_forward.3} parent=72 // pred_check_branch
          %304 = sbr.rel (%p302) target = $region77
        $region76: #{gcn_forward.3} parent=72 // pred_region
          _
        $region77: #{gcn_forward.3} parent=72 // pred_fallthru
          _
        %s305 = sand.u32 %s37, 1
        %s306 = sand.u32 %s37, 1
        %s307 = smul.addr %s306, 64
        %s308 = scalar_lea.vmem [#allocation3], %s307
        %p309 = pneg %p50
        %p310 = pneg %p47
        %s311 = smul.u32 16, %s20
        %p312 = scmp.lt.s32.totalorder %s311, 63
        %s313 = scalar_select %p312, %s311, 63
        %s314 = smul.addr %s313, 4
        %s315 = scalar_lea.vmem %s1, %s314
        %p316 = pneg %p76
        %p317 = pneg %p73
        %p318 = pneg %p97
        %p319 = pneg %p94
        %p320 = pneg %p118
        %p321 = pneg %p115
        %p322 = pneg %p144
        %p323 = pneg %p141
        %s324 = smul.u32 16, %s19
        %p325 = scmp.lt.s32.totalorder %s324, 63
        %s326 = scalar_select %p325, %s324, 63
        %s327 = smul.addr %s326, 8
        %s328 = scalar_lea.vmem %s4, %s327
        %s329 = smul.u32 16, %s19
        %s330 = smul.u32 16, %s20
        %p331 = scmp.lt.s32.totalorder %s330, 63
        %s332 = scalar_select %p331, %s330, 63
        %s333 = smul.addr %s332, 4
        %s334 = scalar_lea.vmem %s1, %s333
        %s335 = smul.u32 16, %s20
        %s336 = smul.u32 16, %s19
        %p337 = scmp.lt.s32.totalorder %s336, 63
        %s338 = scalar_select %p337, %s336, 63
        %s339 = smul.addr %s338, 8
        %s340 = scalar_lea.vmem %s4, %s339
        %s341 = smul.u32 16, %s19
        %p342 = scmp.eq.s32.totalorder %s20, 0
        // Predicated region
        $region78: #{gcn_forward.3} parent=72 // pred_check
          %p343 = pneg %p342
        $region79: #{gcn_forward.3} parent=72 // pred_check_branch
          %345 = sbr.rel (%p343) target = $region81
        $region80: #{gcn_forward.3} parent=72 // pred_region
          %346 = vst [vmem:[#allocation2] sm:$0xff] 0.0
          %347 = vst [vmem:[#allocation2 + $0x8] sm:$0xff] 0.0
          %348 = vst [vmem:[#allocation2 + $0x10] sm:$0xff] 0.0
          %349 = vst [vmem:[#allocation2 + $0x18] sm:$0xff] 0.0
          %350 = vst [vmem:[#allocation2 + $0x20] sm:$0xff] 0.0
          %351 = vst [vmem:[#allocation2 + $0x28] sm:$0xff] 0.0
          %352 = vst [vmem:[#allocation2 + $0x30] sm:$0xff] 0.0
          %353 = vst [vmem:[#allocation2 + $0x38] sm:$0xff] 0.0
          %354 = vst [vmem:[#allocation2 + $0x40] sm:$0xff] 0.0
          %355 = vst [vmem:[#allocation2 + $0x48] sm:$0xff] 0.0
          %356 = vst [vmem:[#allocation2 + $0x50] sm:$0xff] 0.0
          %357 = vst [vmem:[#allocation2 + $0x58] sm:$0xff] 0.0
          %358 = vst [vmem:[#allocation2 + $0x60] sm:$0xff] 0.0
          %359 = vst [vmem:[#allocation2 + $0x68] sm:$0xff] 0.0
          %360 = vst [vmem:[#allocation2 + $0x70] sm:$0xff] 0.0
          %361 = vst [vmem:[#allocation2 + $0x78] sm:$0xff] 0.0
        $region81: #{gcn_forward.3} parent=72 // pred_fallthru
          _
        %v362 = vld [vmem:[#allocation2] sm:$0xff]
        %v363 = vld [vmem:[#allocation2 + $0x8] sm:$0xff]
        %v364 = vld [vmem:[#allocation2 + $0x10] sm:$0xff]
        %v365 = vld [vmem:[#allocation2 + $0x18] sm:$0xff]
        %v366 = vld [vmem:[#allocation2 + $0x20] sm:$0xff]
        %v367 = vld [vmem:[#allocation2 + $0x28] sm:$0xff]
        %v368 = vld [vmem:[#allocation2 + $0x30] sm:$0xff]
        %v369 = vld [vmem:[#allocation2 + $0x38] sm:$0xff]
        %v370 = vld [vmem:[#allocation2 + $0x40] sm:$0xff]
        %v371 = vld [vmem:[#allocation2 + $0x48] sm:$0xff]
        %v372 = vld [vmem:[#allocation2 + $0x50] sm:$0xff]
        %v373 = vld [vmem:[#allocation2 + $0x58] sm:$0xff]
        %v374 = vld [vmem:[#allocation2 + $0x60] sm:$0xff]
        %v375 = vld [vmem:[#allocation2 + $0x68] sm:$0xff]
        %v376 = vld [vmem:[#allocation2 + $0x70] sm:$0xff]
        %v377 = vld [vmem:[#allocation2 + $0x78] sm:$0xff]
        %v378 = vld [vmem:[%s301] sm:$0xf]
        %v379 = vld [vmem:[%s301 + $0x4] sm:$0xf]
        %v380 = vld [vmem:[%s301 + $0x8] sm:$0xf]
        %v381 = vld [vmem:[%s301 + $0xc] sm:$0xf]
        %v382 = vld [vmem:[%s301 + $0x10] sm:$0xf]
        %v383 = vld [vmem:[%s301 + $0x14] sm:$0xf]
        %v384 = vld [vmem:[%s301 + $0x18] sm:$0xf]
        %v385 = vld [vmem:[%s301 + $0x1c] sm:$0xf]
        %v386 = vld [vmem:[%s301 + $0x20] sm:$0xf]
        %v387 = vld [vmem:[%s301 + $0x24] sm:$0xf]
        %v388 = vld [vmem:[%s301 + $0x28] sm:$0xf]
        %v389 = vld [vmem:[%s301 + $0x2c] sm:$0xf]
        %v390 = vld [vmem:[%s301 + $0x30] sm:$0xf]
        %v391 = vld [vmem:[%s301 + $0x34] sm:$0xf]
        %v392 = vld [vmem:[%s301 + $0x38] sm:$0xf]
        %v393 = vld [vmem:[%s301 + $0x3c] sm:$0xf]
        %v394 = vld [vmem:[%s334] sm:$0xf]
        %v395 = vld [vmem:[%s334 + $0x4] sm:$0xf]
        %v396 = vld [vmem:[%s334 + $0x8] sm:$0xf]
        %v397 = vld [vmem:[%s334 + $0xc] sm:$0xf]
        %v398 = vld [vmem:[%s334 + $0x10] sm:$0xf]
        %v399 = vld [vmem:[%s334 + $0x14] sm:$0xf]
        %v400 = vld [vmem:[%s334 + $0x18] sm:$0xf]
        %v401 = vld [vmem:[%s334 + $0x1c] sm:$0xf]
        %v402 = vld [vmem:[%s334 + $0x20] sm:$0xf]
        %v403 = vld [vmem:[%s334 + $0x24] sm:$0xf]
        %v404 = vld [vmem:[%s334 + $0x28] sm:$0xf]
        %v405 = vld [vmem:[%s334 + $0x2c] sm:$0xf]
        %v406 = vld [vmem:[%s334 + $0x30] sm:$0xf]
        %v407 = vld [vmem:[%s334 + $0x34] sm:$0xf]
        %v408 = vld [vmem:[%s334 + $0x38] sm:$0xf]
        %v409 = vld [vmem:[%s334 + $0x3c] sm:$0xf]
        %v426 = vunpack.c.l.b16 %v378
        %v427 = vunpack.c.l.b16 %v379
        %v428 = vunpack.c.l.b16 %v380
        %v429 = vunpack.c.l.b16 %v381
        %v430 = vunpack.c.l.b16 %v382
        %v431 = vunpack.c.l.b16 %v383
        %v432 = vunpack.c.l.b16 %v384
        %v433 = vunpack.c.l.b16 %v385
        %v434 = vunpack.c.l.b16 %v386
        %v435 = vunpack.c.l.b16 %v387
        %v436 = vunpack.c.l.b16 %v388
        %v437 = vunpack.c.l.b16 %v389
        %v438 = vunpack.c.l.b16 %v390
        %v439 = vunpack.c.l.b16 %v391
        %v440 = vunpack.c.l.b16 %v392
        %v441 = vunpack.c.l.b16 %v393
        %v442 = vpack.c.b16 %v427, %v426
        %v443 = vpack.c.b16 %v429, %v428
        %v444 = vpack.c.b16 %v431, %v430
        %v445 = vpack.c.b16 %v433, %v432
        %v446 = vpack.c.b16 %v435, %v434
        %v447 = vpack.c.b16 %v437, %v436
        %v448 = vpack.c.b16 %v439, %v438
        %v449 = vpack.c.b16 %v441, %v440
        %v474 = vunpack.c.l.b16 %v394
        %v475 = vunpack.c.l.b16 %v395
        %v476 = vunpack.c.l.b16 %v396
        %v477 = vunpack.c.l.b16 %v397
        %v478 = vunpack.c.l.b16 %v398
        %v479 = vunpack.c.l.b16 %v399
        %v480 = vunpack.c.l.b16 %v400
        %v481 = vunpack.c.l.b16 %v401
        %v482 = vunpack.c.l.b16 %v402
        %v483 = vunpack.c.l.b16 %v403
        %v484 = vunpack.c.l.b16 %v404
        %v485 = vunpack.c.l.b16 %v405
        %v486 = vunpack.c.l.b16 %v406
        %v487 = vunpack.c.l.b16 %v407
        %v488 = vunpack.c.l.b16 %v408
        %v489 = vunpack.c.l.b16 %v409
        %v490 = vpack.c.b16 %v475, %v474
        %v491 = vpack.c.b16 %v477, %v476
        %v492 = vpack.c.b16 %v479, %v478
        %v493 = vpack.c.b16 %v481, %v480
        %v494 = vpack.c.b16 %v483, %v482
        %v495 = vpack.c.b16 %v485, %v484
        %v496 = vpack.c.b16 %v487, %v486
        %v497 = vpack.c.b16 %v489, %v488
        %506 = vmatpush.bf16.msra.mxu0 %v497
        %507 = vmatpush.bf16.msra.mxu0 %v496
        %508 = vmatpush.bf16.msra.mxu0 %v495
        %509 = vmatpush.bf16.msra.mxu0 %v494
        %510 = vmatpush.bf16.msra.mxu0 %v493
        %511 = vmatpush.bf16.msra.mxu0 %v492
        %512 = vmatpush.bf16.msra.mxu0 %v491
        %513 = vmatpush.bf16.msra.mxu0 %v490
        %514 = vmatmul.bf16.gmra.mxu0 %v442
        %v515 = vpop.f32.mrf.mxu0
        %v516 = vadd.f32 0.0, %v515
        %v517 = vpop.f32.mrf.mxu0
        %v518 = vadd.f32 0.0, %v517
        %519 = vmatmul.bf16.gmra.mxu0 %v443
        %v520 = vpop.f32.mrf.mxu0
        %v521 = vadd.f32 0.0, %v520
        %v522 = vpop.f32.mrf.mxu0
        %v523 = vadd.f32 0.0, %v522
        %524 = vmatmul.bf16.gmra.mxu0 %v444
        %v525 = vpop.f32.mrf.mxu0
        %v526 = vadd.f32 0.0, %v525
        %v527 = vpop.f32.mrf.mxu0
        %v528 = vadd.f32 0.0, %v527
        %529 = vmatmul.bf16.gmra.mxu0 %v445
        %v530 = vpop.f32.mrf.mxu0
        %v531 = vadd.f32 0.0, %v530
        %v532 = vpop.f32.mrf.mxu0
        %v533 = vadd.f32 0.0, %v532
        %534 = vmatmul.bf16.gmra.mxu0 %v446
        %v535 = vpop.f32.mrf.mxu0
        %v536 = vadd.f32 0.0, %v535
        %v537 = vpop.f32.mrf.mxu0
        %v538 = vadd.f32 0.0, %v537
        %539 = vmatmul.bf16.gmra.mxu0 %v447
        %v540 = vpop.f32.mrf.mxu0
        %v541 = vadd.f32 0.0, %v540
        %v542 = vpop.f32.mrf.mxu0
        %v543 = vadd.f32 0.0, %v542
        %544 = vmatmul.bf16.gmra.mxu0 %v448
        %v545 = vpop.f32.mrf.mxu0
        %v546 = vadd.f32 0.0, %v545
        %v547 = vpop.f32.mrf.mxu0
        %v548 = vadd.f32 0.0, %v547
        %549 = vmatmul.bf16.gmra.mxu0 %v449
        %v550 = vpop.f32.mrf.mxu0
        %v551 = vadd.f32 0.0, %v550
        %v552 = vpop.f32.mrf.mxu0
        %v553 = vadd.f32 0.0, %v552
        %554 = vdwg.mxu0
        %v555 = vadd.f32 %v362, %v516
        %v556 = vadd.f32 %v363, %v518
        %v557 = vadd.f32 %v364, %v521
        %v558 = vadd.f32 %v365, %v523
        %v559 = vadd.f32 %v366, %v526
        %v560 = vadd.f32 %v367, %v528
        %v561 = vadd.f32 %v368, %v531
        %v562 = vadd.f32 %v369, %v533
        %v563 = vadd.f32 %v370, %v536
        %v564 = vadd.f32 %v371, %v538
        %v565 = vadd.f32 %v372, %v541
        %v566 = vadd.f32 %v373, %v543
        %v567 = vadd.f32 %v374, %v546
        %v568 = vadd.f32 %v375, %v548
        %v569 = vadd.f32 %v376, %v551
        %v570 = vadd.f32 %v377, %v553
        %571 = vst [vmem:[#allocation2] sm:$0xff] %v555
        %572 = vst [vmem:[#allocation2 + $0x8] sm:$0xff] %v556
        %573 = vst [vmem:[#allocation2 + $0x10] sm:$0xff] %v557
        %574 = vst [vmem:[#allocation2 + $0x18] sm:$0xff] %v558
        %575 = vst [vmem:[#allocation2 + $0x20] sm:$0xff] %v559
        %576 = vst [vmem:[#allocation2 + $0x28] sm:$0xff] %v560
        %577 = vst [vmem:[#allocation2 + $0x30] sm:$0xff] %v561
        %578 = vst [vmem:[#allocation2 + $0x38] sm:$0xff] %v562
        %579 = vst [vmem:[#allocation2 + $0x40] sm:$0xff] %v563
        %580 = vst [vmem:[#allocation2 + $0x48] sm:$0xff] %v564
        %581 = vst [vmem:[#allocation2 + $0x50] sm:$0xff] %v565
        %582 = vst [vmem:[#allocation2 + $0x58] sm:$0xff] %v566
        %583 = vst [vmem:[#allocation2 + $0x60] sm:$0xff] %v567
        %584 = vst [vmem:[#allocation2 + $0x68] sm:$0xff] %v568
        %585 = vst [vmem:[#allocation2 + $0x70] sm:$0xff] %v569
        %586 = vst [vmem:[#allocation2 + $0x78] sm:$0xff] %v570
        %p587 = scmp.eq.s32.totalorder %s20, 3
        // Predicated region
        $region82: #{gcn_forward.3} parent=72 // pred_check
          %p588 = pneg %p587
        $region83: #{gcn_forward.3} parent=72 // pred_check_branch
          %590 = sbr.rel (%p588) target = $region85
        $region84: #{gcn_forward.3} parent=72 // pred_region
          %v591 = vld [vmem:[#allocation2] sm:$0xff]
          %v592 = vld [vmem:[#allocation2 + $0x8] sm:$0xff]
          %v593 = vld [vmem:[#allocation2 + $0x10] sm:$0xff]
          %v594 = vld [vmem:[#allocation2 + $0x18] sm:$0xff]
          %v595 = vld [vmem:[#allocation2 + $0x20] sm:$0xff]
          %v596 = vld [vmem:[#allocation2 + $0x28] sm:$0xff]
          %v597 = vld [vmem:[#allocation2 + $0x30] sm:$0xff]
          %v598 = vld [vmem:[#allocation2 + $0x38] sm:$0xff]
          %v599 = vld [vmem:[#allocation2 + $0x40] sm:$0xff]
          %v600 = vld [vmem:[#allocation2 + $0x48] sm:$0xff]
          %v601 = vld [vmem:[#allocation2 + $0x50] sm:$0xff]
          %v602 = vld [vmem:[#allocation2 + $0x58] sm:$0xff]
          %v603 = vld [vmem:[#allocation2 + $0x60] sm:$0xff]
          %v604 = vld [vmem:[#allocation2 + $0x68] sm:$0xff]
          %v605 = vld [vmem:[#allocation2 + $0x70] sm:$0xff]
          %v606 = vld [vmem:[#allocation2 + $0x78] sm:$0xff]
          %v607 = vld [vmem:[%s2] sm:$0xff]
          %v608 = vld [vmem:[%s2 + $0x8] sm:$0xff]
          %v609 = vld [vmem:[%s2 + $0x10] sm:$0xff]
          %v610 = vld [vmem:[%s2 + $0x18] sm:$0xff]
          %v611 = vld [vmem:[%s2 + $0x20] sm:$0xff]
          %v612 = vld [vmem:[%s2 + $0x28] sm:$0xff]
          %v613 = vld [vmem:[%s2 + $0x30] sm:$0xff]
          %v614 = vld [vmem:[%s2 + $0x38] sm:$0xff]
          %v615 = vld [vmem:[%s2 + $0x40] sm:$0xff]
          %v616 = vld [vmem:[%s2 + $0x48] sm:$0xff]
          %v617 = vld [vmem:[%s2 + $0x50] sm:$0xff]
          %v618 = vld [vmem:[%s2 + $0x58] sm:$0xff]
          %v619 = vld [vmem:[%s2 + $0x60] sm:$0xff]
          %v620 = vld [vmem:[%s2 + $0x68] sm:$0xff]
          %v621 = vld [vmem:[%s2 + $0x70] sm:$0xff]
          %v622 = vld [vmem:[%s2 + $0x78] sm:$0xff]
          %v623 = vld [vmem:[%s3] sm:$0x1]
          %v625 = vperm.slane %v623, 0
          %627 = vmatpush.msra.mxu0 %v622
          %628 = vmatpush.msra.mxu0 %v621
          %629 = vmatpush.msra.mxu0 %v620
          %630 = vmatpush.msra.mxu0 %v619
          %631 = vmatpush.msra.mxu0 %v618
          %632 = vmatpush.msra.mxu0 %v617
          %633 = vmatpush.msra.mxu0 %v616
          %634 = vmatpush.msra.mxu0 %v615
          %635 = vmatpush.msra.mxu0 %v614
          %636 = vmatpush.msra.mxu0 %v613
          %637 = vmatpush.msra.mxu0 %v612
          %638 = vmatpush.msra.mxu0 %v611
          %639 = vmatpush.msra.mxu0 %v610
          %640 = vmatpush.msra.mxu0 %v609
          %641 = vmatpush.msra.mxu0 %v608
          %642 = vmatpush.msra.mxu0 %v607
          %643 = vmatmul.f32.gmra.mxu0 %v591
          %v644 = vpop.f32.mrf.mxu0
          %v645 = vadd.f32 %v625, %v644
          %646 = vmatmul.f32.gmra.mxu0 %v592
          %v647 = vpop.f32.mrf.mxu0
          %v648 = vadd.f32 %v625, %v647
          %649 = vmatmul.f32.gmra.mxu0 %v593
          %v650 = vpop.f32.mrf.mxu0
          %v651 = vadd.f32 %v625, %v650
          %652 = vmatmul.f32.gmra.mxu0 %v594
          %v653 = vpop.f32.mrf.mxu0
          %v654 = vadd.f32 %v625, %v653
          %655 = vmatmul.f32.gmra.mxu0 %v595
          %v656 = vpop.f32.mrf.mxu0
          %v657 = vadd.f32 %v625, %v656
          %658 = vmatmul.f32.gmra.mxu0 %v596
          %v659 = vpop.f32.mrf.mxu0
          %v660 = vadd.f32 %v625, %v659
          %661 = vmatmul.f32.gmra.mxu0 %v597
          %v662 = vpop.f32.mrf.mxu0
          %v663 = vadd.f32 %v625, %v662
          %664 = vmatmul.f32.gmra.mxu0 %v598
          %v665 = vpop.f32.mrf.mxu0
          %v666 = vadd.f32 %v625, %v665
          %667 = vmatmul.f32.gmra.mxu0 %v599
          %v668 = vpop.f32.mrf.mxu0
          %v669 = vadd.f32 %v625, %v668
          %670 = vmatmul.f32.gmra.mxu0 %v600
          %v671 = vpop.f32.mrf.mxu0
          %v672 = vadd.f32 %v625, %v671
          %673 = vmatmul.f32.gmra.mxu0 %v601
          %v674 = vpop.f32.mrf.mxu0
          %v675 = vadd.f32 %v625, %v674
          %676 = vmatmul.f32.gmra.mxu0 %v602
          %v677 = vpop.f32.mrf.mxu0
          %v678 = vadd.f32 %v625, %v677
          %679 = vmatmul.f32.gmra.mxu0 %v603
          %v680 = vpop.f32.mrf.mxu0
          %v681 = vadd.f32 %v625, %v680
          %682 = vmatmul.f32.gmra.mxu0 %v604
          %v683 = vpop.f32.mrf.mxu0
          %v684 = vadd.f32 %v625, %v683
          %685 = vmatmul.f32.gmra.mxu0 %v605
          %v686 = vpop.f32.mrf.mxu0
          %v687 = vadd.f32 %v625, %v686
          %688 = vmatmul.f32.gmra.mxu0 %v606
          %v689 = vpop.f32.mrf.mxu0
          %v690 = vadd.f32 %v625, %v689
          %691 = vdwg.mxu0
          %692 = vst [vmem:[%s340] sm:$0xff] %v645
          %693 = vst [vmem:[%s340 + $0x8] sm:$0xff] %v648
          %694 = vst [vmem:[%s340 + $0x10] sm:$0xff] %v651
          %695 = vst [vmem:[%s340 + $0x18] sm:$0xff] %v654
          %696 = vst [vmem:[%s340 + $0x20] sm:$0xff] %v657
          %697 = vst [vmem:[%s340 + $0x28] sm:$0xff] %v660
          %698 = vst [vmem:[%s340 + $0x30] sm:$0xff] %v663
          %699 = vst [vmem:[%s340 + $0x38] sm:$0xff] %v666
          %700 = vst [vmem:[%s340 + $0x40] sm:$0xff] %v669
          %701 = vst [vmem:[%s340 + $0x48] sm:$0xff] %v672
          %702 = vst [vmem:[%s340 + $0x50] sm:$0xff] %v675
          %703 = vst [vmem:[%s340 + $0x58] sm:$0xff] %v678
          %704 = vst [vmem:[%s340 + $0x60] sm:$0xff] %v681
          %705 = vst [vmem:[%s340 + $0x68] sm:$0xff] %v684
          %706 = vst [vmem:[%s340 + $0x70] sm:$0xff] %v687
          %707 = vst [vmem:[%s340 + $0x78] sm:$0xff] %v690
        $region85: #{gcn_forward.3} parent=72 // pred_fallthru
          _
        %s708 = smul.u32 16, %s19
        %p709 = scmp.lt.s32.totalorder %s708, 63
        %s710 = scalar_select %p709, %s708, 63
        %s711 = smul.addr %s710, 8
        %s712 = scalar_lea.vmem %s4, %s711
        // Predicated region
        $region86: #{gcn_forward.3} parent=72 // pred_check
          %p713 = pneg %p141
        $region87: #{gcn_forward.3} parent=72 // pred_check_branch
          %715 = sbr.rel (%p713) target = $region89
        $region88: #{gcn_forward.3} parent=72 // pred_region
          %s716 = smul.u32 16, %s19
        $region89: #{gcn_forward.3} parent=72 // pred_fallthru
          _
      $region73: #{gcn_forward.3} parent=5 // pred_fallthru
        _
      %p717 = scmp.le.s32.totalorder 2, %s10
      // Predicated region
      $region90: #{gcn_forward.3} parent=5 // pred_check
        %p718 = pneg %p717
      $region91: #{gcn_forward.3} parent=5 // pred_check_branch
        %720 = sbr.rel (%p718) target = $region93
      $region92: #{gcn_forward.3} parent=5 // pred_region
        %s721 = ssub.s32 %s10, 2
        // Predicated region
        $region94: #{gcn_forward.3} parent=92 // pred_check
          %p722 = pneg %p147
        $region95: #{gcn_forward.3} parent=92 // pred_check_branch
          %724 = sbr.rel (%p722) target = $region97
        $region96: #{gcn_forward.3} parent=92 // pred_region
          %s725 = smul.u32 16, %s21
          %p726 = scmp.lt.s32.totalorder %s725, 63
          %s727 = scalar_select %p726, %s725, 63
          %s728 = smul.addr %s727, 8
          %s729 = scalar_lea.vmem %s4, %s728
        $region97: #{gcn_forward.3} parent=92 // pred_fallthru
          _
      $region93: #{gcn_forward.3} parent=5 // pred_fallthru
        _
    $region6: #{gcn_forward.3} parent=1 // loop_footer
      %s14 = sadd.s32 1, %s10
    $region7: #{gcn_forward.3} parent=1 // loop_footer_branch
      %9 = sbr.rel target = $region3
    $region8: #{gcn_forward.3} parent=1 // loop_exit
      _

</llo_original>
